<compile_context>
chip_gen: v7x
topology: tpu7x:2x2x1
jax: 0.10.0
libtpu: 0.0.40
codegen_flags: <defaults>
</compile_context>

<pallas_src>
import jax
import jax.numpy as jnp
from jax.experimental import pallas as pl
from jax.experimental.pallas import tpu as pltpu


# ----------------------------------------------------------------------------
# Pallas kernel: full encoder forward
#   h = relu(A x W1 + b1); h = relu(A h Wi + bi) for i in 0..2; out = A h W3 + b3
# a_hbm_ref lives in HBM (ANY); everything else is untiled VMEM, lane-dense
# (last dim a multiple of 128).  a/x/w/h are bf16; biases & accumulation f32.
# ----------------------------------------------------------------------------
def _encoder_kernel(a_hbm_ref, x_ref, w1_ref, b1_ref, ws_ref, bs_ref, o_ref,
                    a_vmem, a_sem):
    # Kick off the A_hat HBM -> VMEM DMA; it overlaps with the X @ W1 matmul
    # below, which does not need A.
    a_copy = pltpu.make_async_copy(a_hbm_ref, a_vmem, a_sem)
    a_copy.start()

    b1 = b1_ref[...]          # (1, Hp)    f32, hoisted
    bs = bs_ref[...]          # (4, 1, Hp) f32, hoisted once

    # Layer 1 feature transform (no A needed yet): X @ W1, f32 accum -> bf16.
    xw = jnp.dot(x_ref[...], w1_ref[...],
                 preferred_element_type=jnp.float32).astype(jnp.bfloat16)

    a_copy.wait()
    a = a_vmem[...]           # (Np, Np) bf16 normalized adjacency

    # Layer 1 aggregation + fused bias/ReLU/downcast.
    h = jnp.maximum(
        jnp.dot(a, xw, preferred_element_type=jnp.float32) + b1, 0.0
    ).astype(jnp.bfloat16)

    # Layers 2..4 (hidden -> hidden, ReLU).
    for i in range(3):
        hw = jnp.dot(h, ws_ref[i],
                     preferred_element_type=jnp.float32).astype(jnp.bfloat16)
        h = jnp.maximum(
            jnp.dot(a, hw, preferred_element_type=jnp.float32) + bs[i], 0.0
        ).astype(jnp.bfloat16)

    # Layer 5 (hidden -> hidden, NO ReLU).
    hw = jnp.dot(h, ws_ref[3],
                 preferred_element_type=jnp.float32).astype(jnp.bfloat16)
    out = jnp.dot(a, hw, preferred_element_type=jnp.float32) + bs[3]
    o_ref[...] = out.astype(o_ref.dtype)


def _round_up(n, m):
    return ((n + m - 1) // m) * m


def _pad_to(x, target_shape):
    pads = [(0, t - s) for s, t in zip(x.shape, target_shape)]
    return jnp.pad(x, pads)


def graph_encoder4link_forward(a_hat, x, w1, b1, ws, bs, out_dtype=jnp.float32):
    """Run the fused 5-layer GCN encoder in one pallas_call.

    a_hat : (N, N)    float32  normalized adjacency (dense)
    x     : (N, Fin)  float32  node features
    w1    : (Fin, H)  float32  conv1 weight
    b1    : (1, H)    float32  conv1 bias
    ws    : (4, H, H) float32  convs[0..3] weights
    bs    : (4, 1, H) float32  convs[0..3] biases
    returns (N, H) out_dtype
    """
    N, Fin = x.shape
    H = w1.shape[1]

    # Lane-dense padding: zero-pad node / feature / hidden dims to 128 multiples.
    Np = _round_up(N, 128)
    Fp = _round_up(Fin, 128)
    Hp = _round_up(H, 128)

    a_p = _pad_to(a_hat, (Np, Np)).astype(jnp.bfloat16)
    x_p = _pad_to(x, (Np, Fp)).astype(jnp.bfloat16)
    w1_p = _pad_to(w1, (Fp, Hp)).astype(jnp.bfloat16)
    b1_p = _pad_to(b1, (1, Hp)).astype(jnp.float32)
    ws_p = _pad_to(ws, (ws.shape[0], Hp, Hp)).astype(jnp.bfloat16)
    bs_p = _pad_to(bs, (bs.shape[0], 1, Hp)).astype(jnp.float32)

    # Actual single-buffered VMEM footprint (A scratch + operands + output +
    # live intermediates), plus headroom; clamped to the device's VMEM capacity
    # so the request is valid on v7x (64 MiB) as well as v5e/v6e (128 MiB).
    out_itemsize = jnp.dtype(out_dtype).itemsize
    a_bytes = Np * Np * 2                               # bf16 A in VMEM scratch
    x_bytes = Np * Fp * 2
    w_bytes = Fp * Hp * 2 + 4 * Hp * Hp * 2
    b_bytes = 5 * 8 * max(Hp, 128) * 4                  # tiny, tile-padded biases
    out_bytes = Np * Hp * out_itemsize
    act_bytes = Np * Hp * 4 + 2 * Np * Hp * 2           # 1 f32 + 2 bf16 live temps
    footprint = a_bytes + x_bytes + w_bytes + b_bytes + out_bytes + act_bytes
    try:
        vmem_cap = int(pltpu.get_tpu_info().vmem_capacity_bytes)
    except Exception:
        vmem_cap = 64 << 20                             # conservative (v7x) fallback
    vmem_limit = int(min(max(footprint + (8 << 20), 32 << 20),
                         vmem_cap - (2 << 20)))

    vmem = lambda: pl.BlockSpec(memory_space=pltpu.MemorySpace.VMEM)

    out_padded = pl.pallas_call(
        _encoder_kernel,
        out_shape=jax.ShapeDtypeStruct((Np, Hp), out_dtype),
        in_specs=[
            pl.BlockSpec(memory_space=pl.ANY),   # A_hat stays in HBM, DMA'd manually
            vmem(),                              # x
            vmem(),                              # w1
            vmem(),                              # b1
            vmem(),                              # ws (4, Hp, Hp)
            vmem(),                              # bs (4, 1, Hp)
        ],
        out_specs=vmem(),
        scratch_shapes=[
            pltpu.VMEM((Np, Np), jnp.bfloat16),  # A_hat landing buffer
            pltpu.SemaphoreType.DMA,             # completion semaphore
        ],
        compiler_params=pltpu.CompilerParams(vmem_limit_bytes=vmem_limit),
    )(a_p, x_p, w1_p, b1_p, ws_p, bs_p)

    # Slice the zero-padding back off.
    return out_padded[:N, :H]


# ----------------------------------------------------------------------------
# Glue: build dense normalized adjacency from (edge_index, edge_weight)
# exactly as torch_geometric.nn.GCNConv's gcn_norm does (self loops, sym norm).
# ----------------------------------------------------------------------------
def build_normalized_adjacency(edge_index, edge_weight, num_nodes):
    src = edge_index[0]
    dst = edge_index[1]
    loop = jnp.arange(num_nodes, dtype=src.dtype)

    src = jnp.concatenate([src, loop])
    dst = jnp.concatenate([dst, loop])
    ew = jnp.concatenate([edge_weight, jnp.ones((num_nodes,), edge_weight.dtype)])

    deg = jnp.zeros((num_nodes,), edge_weight.dtype).at[dst].add(ew)
    dinv = jnp.where(deg > 0, 1.0 / jnp.sqrt(deg), 0.0)
    norm = dinv[src] * ew * dinv[dst]

    # A_hat[dst, src] so that out = A_hat @ X aggregates messages into dst.
    a_hat = jnp.zeros((num_nodes, num_nodes), edge_weight.dtype).at[dst, src].add(norm)
    return a_hat


# ----------------------------------------------------------------------------
# Deterministic parameter init (glorot-uniform weights, zero biases — PyG style)
# ----------------------------------------------------------------------------
def glorot(key, fan_in, fan_out):
    limit = jnp.sqrt(6.0 / (fan_in + fan_out))
    return jax.random.uniform(key, (fan_in, fan_out), jnp.float32, -limit, limit)


def init_params(key, in_channels, hidden_dim):
    keys = jax.random.split(key, 5)
    w1 = glorot(keys[0], in_channels, hidden_dim)
    b1 = jnp.zeros((1, hidden_dim), jnp.float32)
    # convs[0..3] are the ones used by forward (convs[4] is dead in the module).
    ws = jnp.stack([glorot(keys[i + 1], hidden_dim, hidden_dim) for i in range(4)])
    bs = jnp.zeros((4, 1, hidden_dim), jnp.float32)
    return w1, b1, ws, bs


if __name__ == "__main__":
    key = jax.random.PRNGKey(0)
    k_x, k_w, k_ew = jax.random.split(key, 3)

    # Small graph: N=16 nodes, in_channels=8, hidden_dim=32
    N, IN_CH, HID = 16, 8, 32

    x = jax.random.normal(k_x, (N, IN_CH), jnp.float32)

    # Deterministic edges: a ring plus a few chords (directed edges both ways).
    ring_src = jnp.arange(N, dtype=jnp.int32)
    ring_dst = (ring_src + 1) % N
    chord_src = jnp.array([0, 3, 5, 7], dtype=jnp.int32)
    chord_dst = jnp.array([8, 11, 13, 15], dtype=jnp.int32)
    src = jnp.concatenate([ring_src, ring_dst, chord_src, chord_dst])
    dst = jnp.concatenate([ring_dst, ring_src, chord_dst, chord_src])
    edge_index = jnp.stack([src, dst])                      # (2, E)
    edge_weight = jax.random.uniform(k_ew, (src.shape[0],), jnp.float32, 0.5, 1.5)

    # batch vector (unused by the forward pass, kept for signature parity)
    batch = jnp.zeros((N,), jnp.int32)

    w1, b1, ws, bs = init_params(k_w, IN_CH, HID)
    a_hat = build_normalized_adjacency(edge_index, edge_weight, N)

    out = graph_encoder4link_forward(a_hat, x, w1, b1, ws, bs)
    out = jax.block_until_ready(out)

    assert out.shape == (N, HID)
    assert bool(jnp.all(jnp.isfinite(out)))
    print("KERNEL_OK")
</pallas_src>

<mosaic_0001>
module attributes {stable_mosaic.version = 11 : i64} {
  func.func @_encoder_kernel(%arg0: memref<128x128xbf16, #tpu.memory_space<any>>, %arg1: memref<128x128xbf16, #tpu.memory_space<vmem>>, %arg2: memref<128x128xbf16, #tpu.memory_space<vmem>>, %arg3: memref<1x128xf32, #tpu.memory_space<vmem>>, %arg4: memref<4x128x128xbf16, #tpu.memory_space<vmem>>, %arg5: memref<4x1x128xf32, #tpu.memory_space<vmem>>, %arg6: memref<128x128xf32, #tpu.memory_space<vmem>>, %arg7: memref<128x128xbf16, #tpu.memory_space<vmem>>, %arg8: memref<!tpu.dma_semaphore, #tpu.memory_space<semaphore_mem>>) attributes {dimension_semantics = [], scalar_prefetch = 0 : i64, scratch_operands = 2 : i64, tpu.core_type = #tpu.core_type<tc>} {
    tpu.enqueue_dma source(%arg0 : memref<128x128xbf16, #tpu.memory_space<any>>) target(%arg7 : memref<128x128xbf16, #tpu.memory_space<vmem>>) target_semaphore(%arg8 : memref<!tpu.dma_semaphore, #tpu.memory_space<semaphore_mem>>)
    %c0 = arith.constant 0 : index
    %c0_0 = arith.constant 0 : index
    %0 = vector.load %arg3[%c0, %c0_0] : memref<1x128xf32, #tpu.memory_space<vmem>>, vector<1x128xf32>
    %c0_1 = arith.constant 0 : index
    %c0_2 = arith.constant 0 : index
    %c0_3 = arith.constant 0 : index
    %1 = vector.load %arg5[%c0_1, %c0_2, %c0_3] : memref<4x1x128xf32, #tpu.memory_space<vmem>>, vector<4x1x128xf32>
    %c0_4 = arith.constant 0 : index
    %c0_5 = arith.constant 0 : index
    %2 = vector.load %arg1[%c0_4, %c0_5] : memref<128x128xbf16, #tpu.memory_space<vmem>>, vector<128x128xbf16>
    %c0_6 = arith.constant 0 : index
    %c0_7 = arith.constant 0 : index
    %3 = vector.load %arg2[%c0_6, %c0_7] : memref<128x128xbf16, #tpu.memory_space<vmem>>, vector<128x128xbf16>
    %cst = arith.constant dense<0.000000e+00> : vector<128x128xf32>
    %4 = tpu.matmul %2, %3, %cst {dimension_numbers = #tpu.dot_dimension_numbers<[1], [0], [0], [1], [0, 0, 1, 1], [], []>} : vector<128x128xbf16>, vector<128x128xbf16>, vector<128x128xf32> -> vector<128x128xf32>
    %5 = arith.truncf %4 : vector<128x128xf32> to vector<128x128xbf16>
    tpu.wait_dma2 semaphore(%arg8 : memref<!tpu.dma_semaphore, #tpu.memory_space<semaphore_mem>>) src(%arg0 : memref<128x128xbf16, #tpu.memory_space<any>>) dst(%arg7 : memref<128x128xbf16, #tpu.memory_space<vmem>>)
    %c0_8 = arith.constant 0 : index
    %c0_9 = arith.constant 0 : index
    %6 = vector.load %arg7[%c0_8, %c0_9] : memref<128x128xbf16, #tpu.memory_space<vmem>>, vector<128x128xbf16>
    %cst_10 = arith.constant dense<0.000000e+00> : vector<128x128xf32>
    %7 = tpu.matmul %6, %5, %cst_10 {dimension_numbers = #tpu.dot_dimension_numbers<[1], [0], [0], [1], [0, 0, 1, 1], [], []>} : vector<128x128xbf16>, vector<128x128xbf16>, vector<128x128xf32> -> vector<128x128xf32>
    %8 = vector.broadcast %0 : vector<1x128xf32> to vector<128x128xf32>
    %9 = arith.addf %7, %8 : vector<128x128xf32>
    %cst_11 = arith.constant 0.000000e+00 : f32
    %10 = vector.broadcast %cst_11 : f32 to vector<128x128xf32>
    %11 = arith.maximumf %9, %10 : vector<128x128xf32>
    %12 = arith.truncf %11 : vector<128x128xf32> to vector<128x128xbf16>
    %c0_12 = arith.constant 0 : index
    %c0_13 = arith.constant 0 : index
    %c0_14 = arith.constant 0 : index
    %13 = vector.load %arg4[%c0_12, %c0_13, %c0_14] : memref<4x128x128xbf16, #tpu.memory_space<vmem>>, vector<1x128x128xbf16>
    %14 = vector.shape_cast %13 : vector<1x128x128xbf16> to vector<128x128xbf16>
    %cst_15 = arith.constant dense<0.000000e+00> : vector<128x128xf32>
    %15 = tpu.matmul %12, %14, %cst_15 {dimension_numbers = #tpu.dot_dimension_numbers<[1], [0], [0], [1], [0, 0, 1, 1], [], []>} : vector<128x128xbf16>, vector<128x128xbf16>, vector<128x128xf32> -> vector<128x128xf32>
    %16 = arith.truncf %15 : vector<128x128xf32> to vector<128x128xbf16>
    %cst_16 = arith.constant dense<0.000000e+00> : vector<128x128xf32>
    %17 = tpu.matmul %6, %16, %cst_16 {dimension_numbers = #tpu.dot_dimension_numbers<[1], [0], [0], [1], [0, 0, 1, 1], [], []>} : vector<128x128xbf16>, vector<128x128xbf16>, vector<128x128xf32> -> vector<128x128xf32>
    %18 = vector.extract_strided_slice %1 {offsets = [0, 0, 0], sizes = [1, 1, 128], strides = [1, 1, 1]} : vector<4x1x128xf32> to vector<1x1x128xf32>
    %19 = vector.shape_cast %18 : vector<1x1x128xf32> to vector<1x128xf32>
    %20 = vector.broadcast %19 : vector<1x128xf32> to vector<128x128xf32>
    %21 = arith.addf %17, %20 : vector<128x128xf32>
    %cst_17 = arith.constant 0.000000e+00 : f32
    %22 = vector.broadcast %cst_17 : f32 to vector<128x128xf32>
    %23 = arith.maximumf %21, %22 : vector<128x128xf32>
    %24 = arith.truncf %23 : vector<128x128xf32> to vector<128x128xbf16>
    %c1 = arith.constant 1 : index
    %c0_18 = arith.constant 0 : index
    %c0_19 = arith.constant 0 : index
    %25 = vector.load %arg4[%c1, %c0_18, %c0_19] : memref<4x128x128xbf16, #tpu.memory_space<vmem>>, vector<1x128x128xbf16>
    %26 = vector.shape_cast %25 : vector<1x128x128xbf16> to vector<128x128xbf16>
    %cst_20 = arith.constant dense<0.000000e+00> : vector<128x128xf32>
    %27 = tpu.matmul %24, %26, %cst_20 {dimension_numbers = #tpu.dot_dimension_numbers<[1], [0], [0], [1], [0, 0, 1, 1], [], []>} : vector<128x128xbf16>, vector<128x128xbf16>, vector<128x128xf32> -> vector<128x128xf32>
    %28 = arith.truncf %27 : vector<128x128xf32> to vector<128x128xbf16>
    %cst_21 = arith.constant dense<0.000000e+00> : vector<128x128xf32>
    %29 = tpu.matmul %6, %28, %cst_21 {dimension_numbers = #tpu.dot_dimension_numbers<[1], [0], [0], [1], [0, 0, 1, 1], [], []>} : vector<128x128xbf16>, vector<128x128xbf16>, vector<128x128xf32> -> vector<128x128xf32>
    %30 = vector.extract_strided_slice %1 {offsets = [1, 0, 0], sizes = [1, 1, 128], strides = [1, 1, 1]} : vector<4x1x128xf32> to vector<1x1x128xf32>
    %31 = vector.shape_cast %30 : vector<1x1x128xf32> to vector<1x128xf32>
    %32 = vector.broadcast %31 : vector<1x128xf32> to vector<128x128xf32>
    %33 = arith.addf %29, %32 : vector<128x128xf32>
    %cst_22 = arith.constant 0.000000e+00 : f32
    %34 = vector.broadcast %cst_22 : f32 to vector<128x128xf32>
    %35 = arith.maximumf %33, %34 : vector<128x128xf32>
    %36 = arith.truncf %35 : vector<128x128xf32> to vector<128x128xbf16>
    %c2 = arith.constant 2 : index
    %c0_23 = arith.constant 0 : index
    %c0_24 = arith.constant 0 : index
    %37 = vector.load %arg4[%c2, %c0_23, %c0_24] : memref<4x128x128xbf16, #tpu.memory_space<vmem>>, vector<1x128x128xbf16>
    %38 = vector.shape_cast %37 : vector<1x128x128xbf16> to vector<128x128xbf16>
    %cst_25 = arith.constant dense<0.000000e+00> : vector<128x128xf32>
    %39 = tpu.matmul %36, %38, %cst_25 {dimension_numbers = #tpu.dot_dimension_numbers<[1], [0], [0], [1], [0, 0, 1, 1], [], []>} : vector<128x128xbf16>, vector<128x128xbf16>, vector<128x128xf32> -> vector<128x128xf32>
    %40 = arith.truncf %39 : vector<128x128xf32> to vector<128x128xbf16>
    %cst_26 = arith.constant dense<0.000000e+00> : vector<128x128xf32>
    %41 = tpu.matmul %6, %40, %cst_26 {dimension_numbers = #tpu.dot_dimension_numbers<[1], [0], [0], [1], [0, 0, 1, 1], [], []>} : vector<128x128xbf16>, vector<128x128xbf16>, vector<128x128xf32> -> vector<128x128xf32>
    %42 = vector.extract_strided_slice %1 {offsets = [2, 0, 0], sizes = [1, 1, 128], strides = [1, 1, 1]} : vector<4x1x128xf32> to vector<1x1x128xf32>
    %43 = vector.shape_cast %42 : vector<1x1x128xf32> to vector<1x128xf32>
    %44 = vector.broadcast %43 : vector<1x128xf32> to vector<128x128xf32>
    %45 = arith.addf %41, %44 : vector<128x128xf32>
    %cst_27 = arith.constant 0.000000e+00 : f32
    %46 = vector.broadcast %cst_27 : f32 to vector<128x128xf32>
    %47 = arith.maximumf %45, %46 : vector<128x128xf32>
    %48 = arith.truncf %47 : vector<128x128xf32> to vector<128x128xbf16>
    %c3 = arith.constant 3 : index
    %c0_28 = arith.constant 0 : index
    %c0_29 = arith.constant 0 : index
    %49 = vector.load %arg4[%c3, %c0_28, %c0_29] : memref<4x128x128xbf16, #tpu.memory_space<vmem>>, vector<1x128x128xbf16>
    %50 = vector.shape_cast %49 : vector<1x128x128xbf16> to vector<128x128xbf16>
    %cst_30 = arith.constant dense<0.000000e+00> : vector<128x128xf32>
    %51 = tpu.matmul %48, %50, %cst_30 {dimension_numbers = #tpu.dot_dimension_numbers<[1], [0], [0], [1], [0, 0, 1, 1], [], []>} : vector<128x128xbf16>, vector<128x128xbf16>, vector<128x128xf32> -> vector<128x128xf32>
    %52 = arith.truncf %51 : vector<128x128xf32> to vector<128x128xbf16>
    %cst_31 = arith.constant dense<0.000000e+00> : vector<128x128xf32>
    %53 = tpu.matmul %6, %52, %cst_31 {dimension_numbers = #tpu.dot_dimension_numbers<[1], [0], [0], [1], [0, 0, 1, 1], [], []>} : vector<128x128xbf16>, vector<128x128xbf16>, vector<128x128xf32> -> vector<128x128xf32>
    %54 = vector.extract_strided_slice %1 {offsets = [3, 0, 0], sizes = [1, 1, 128], strides = [1, 1, 1]} : vector<4x1x128xf32> to vector<1x1x128xf32>
    %55 = vector.shape_cast %54 : vector<1x1x128xf32> to vector<1x128xf32>
    %56 = vector.broadcast %55 : vector<1x128xf32> to vector<128x128xf32>
    %57 = arith.addf %53, %56 : vector<128x128xf32>
    %c0_32 = arith.constant 0 : index
    %c0_33 = arith.constant 0 : index
    %58 = vector.load %arg6[%c0_32, %c0_33] : memref<128x128xf32, #tpu.memory_space<vmem>>, vector<128x128xf32>
    tpu.vector_store %arg6[%c0_32, %c0_33], %57 {strides = array<i32>} : memref<128x128xf32, #tpu.memory_space<vmem>>, vector<128x128xf32>,
    return
  }
}

</mosaic_0001>

<llo_original>
// kernel: tpu_custom_call.1
$region0: #{tpu_custom_call.1}
  #allocation0 [shape = 'u32[]', space=smem, size = 0x4, offset = 0x4, fixed_abs, tag = 'smem constant byte address 0x4 - core index']
  #allocation1 [shape = 'u32[144,128]{1,0:T(1,128)}', space=vmem, size = 0x12000, scoped, tag = 'internal scratch']
  #allocation2 [shape = 'bf16[128,128]{1,0:T(16,128)(2,1)}', space=vmem, size = 0x8000, scoped, tag = 'scratch operand']
  #allocation3 [shape = 's32[1]{0}', space=sflag, size = 0x4, scoped, tag = 'scratch operand']
  #allocation11 [shape = 's32[]', space=sflag, size = 0x4, offset = 0, fixed_abs, tag = 'sflag constant byte address 0x0 - dummy sync flag']
  #allocation12 [shape = 's32[]', space=sflag, size = 0x4, offset = 0, fixed_abs, tag = 'sflag constant byte address 0x0 - dummy sync flag']
  #allocation13 [shape = 'u32[]', space=smem, size = 0x4, offset = 0x44, fixed_abs, tag = 'smem constant byte address 0x44 - assertion arg 0']
  #allocation14 [shape = 'u32[]', space=smem, size = 0x4, offset = 0x48, fixed_abs, tag = 'smem constant byte address 0x48 - assertion arg 1']
  %s0 = inlined_call_operand.hbm [shape: bf16[128,128], index: 0, kind: input, shape index: {}]
  %s1 = inlined_call_operand.hbm [shape: bf16[128,128], index: 1, kind: input, shape index: {}]
  %s2 = inlined_call_operand.hbm [shape: bf16[128,128], index: 2, kind: input, shape index: {}]
  %s3 = inlined_call_operand.vmem [shape: f32[1,128], index: 3, kind: input, shape index: {}]
  %s4 = inlined_call_operand.hbm [shape: bf16[4,128,128], index: 4, kind: input, shape index: {}]
  %s5 = inlined_call_operand.vmem [shape: f32[4,1,128], index: 5, kind: input, shape index: {}]
  %s6 = inlined_call_operand.hbm [shape: f32[128,128], index: 6, kind: output, shape index: {}]
  %s7 = sld [smem:[#allocation0]]
  $region46: #{tpu_custom_call.1} parent=0
    _
  %s9 = ssub.s32 1, %s7
  %s10 = scalar_select 0, %s9, %s7
  $region1: #{tpu_custom_call.1} parent=0
    #allocation4 [shape = 'u8[32768]{0}', space=vmem, size = 0x8000, scoped, tag = 'input window, operand 1, single buffered']
    #allocation5 [shape = 's32[1]{0}', space=sflag, size = 0x4, scoped, tag = 'scoped memory for tpu_custom_call.1']
    #allocation6 [shape = 's32[1]{0}', space=sflag, size = 0x4, scoped, tag = 'scoped memory for tpu_custom_call.1']
    #allocation7 [shape = 'u8[32768]{0}', space=vmem, size = 0x8000, scoped, tag = 'input window, operand 2, single buffered']
    #allocation8 [shape = 's32[1]{0}', space=sflag, size = 0x4, scoped, tag = 'scoped memory for tpu_custom_call.1']
    #allocation9 [shape = 'u8[131072]{0}', space=vmem, size = 0x20000, scoped, tag = 'input window, operand 4, single buffered']
    #allocation10 [shape = 'u8[65536]{0}', space=vmem, size = 0x10000, scoped, tag = 'output window, operand 0, single buffered']
    %11 = vsyncpa [#allocation5], 0
    %12 = vsyncpa [#allocation8], 0
    %13 = vsyncpa [#allocation6], 0
    // Predicated region
    $region2: #{tpu_custom_call.1} parent=1 // pred_check
      _
    $region3: #{tpu_custom_call.1} parent=1 // pred_check_branch
      %15 = sbr.rel (0) target = $region5
    $region4: #{tpu_custom_call.1} parent=1 // pred_region
      %s17 = ssub.s32 1024, 1024
      %18 = vsyncadd [#allocation5], %s17
      %s19 = sshll.u32 [#allocation4], 4
      %s20 = int_to_ptr.vmem [resolvable:$true] %s19
      %25 = dma.hbm_to_vmem [thread:$0]  %s1, 1024, %s20, [#allocation5], 64, 64, 4
    $region5: #{tpu_custom_call.1} parent=1 // pred_fallthru
      _
    // Predicated region
    $region6: #{tpu_custom_call.1} parent=1 // pred_check
      _
    $region7: #{tpu_custom_call.1} parent=1 // pred_check_branch
      %27 = sbr.rel (0) target = $region9
    $region8: #{tpu_custom_call.1} parent=1 // pred_region
      %s29 = ssub.s32 1024, 1024
      %30 = vsyncadd [#allocation8], %s29
      %s31 = sshll.u32 [#allocation7], 4
      %s32 = int_to_ptr.vmem [resolvable:$true] %s31
      %37 = dma.hbm_to_vmem [thread:$0]  %s2, 1024, %s32, [#allocation8], 64, 64, 4
    $region9: #{tpu_custom_call.1} parent=1 // pred_fallthru
      _
    // Predicated region
    $region10: #{tpu_custom_call.1} parent=1 // pred_check
      _
    $region11: #{tpu_custom_call.1} parent=1 // pred_check_branch
      %39 = sbr.rel (0) target = $region13
    $region12: #{tpu_custom_call.1} parent=1 // pred_region
      _
    $region13: #{tpu_custom_call.1} parent=1 // pred_fallthru
      _
    // Predicated region
    $region14: #{tpu_custom_call.1} parent=1 // pred_check
      _
    $region15: #{tpu_custom_call.1} parent=1 // pred_check_branch
      %41 = sbr.rel (0) target = $region17
    $region16: #{tpu_custom_call.1} parent=1 // pred_region
      %s43 = ssub.s32 4096, 4096
      %44 = vsyncadd [#allocation8], %s43
      %s45 = sshll.u32 [#allocation9], 4
      %s46 = int_to_ptr.vmem [resolvable:$true] %s45
      %51 = dma.hbm_to_vmem [thread:$0]  %s4, 4096, %s46, [#allocation8], 64, 64, 4
    $region17: #{tpu_custom_call.1} parent=1 // pred_fallthru
      _
    // Predicated region
    $region18: #{tpu_custom_call.1} parent=1 // pred_check
      _
    $region19: #{tpu_custom_call.1} parent=1 // pred_check_branch
      %53 = sbr.rel (0) target = $region21
    $region20: #{tpu_custom_call.1} parent=1 // pred_region
      _
    $region21: #{tpu_custom_call.1} parent=1 // pred_fallthru
      _
    // Predicated region
    $region22: #{tpu_custom_call.1} parent=1 // pred_check
      _
    $region23: #{tpu_custom_call.1} parent=1 // pred_check_branch
      %55 = sbr.rel (0) target = $region25
    $region24: #{tpu_custom_call.1} parent=1 // pred_region
      %56 = dma.done [#allocation5], 1024
    $region25: #{tpu_custom_call.1} parent=1 // pred_fallthru
      _
    // Predicated region
    $region26: #{tpu_custom_call.1} parent=1 // pred_check
      _
    $region27: #{tpu_custom_call.1} parent=1 // pred_check_branch
      %58 = sbr.rel (0) target = $region29
    $region28: #{tpu_custom_call.1} parent=1 // pred_region
      %59 = dma.done [#allocation8], 1024
    $region29: #{tpu_custom_call.1} parent=1 // pred_fallthru
      _
    // Predicated region
    $region30: #{tpu_custom_call.1} parent=1 // pred_check
      _
    $region31: #{tpu_custom_call.1} parent=1 // pred_check_branch
      %61 = sbr.rel (0) target = $region33
    $region32: #{tpu_custom_call.1} parent=1 // pred_region
      %62 = dma.done [#allocation8], 4096
    $region33: #{tpu_custom_call.1} parent=1 // pred_fallthru
      _
    // Predicated region
    $region34: #{tpu_custom_call.1} parent=1 // pred_check
      _
    $region35: #{tpu_custom_call.1} parent=1 // pred_check_branch
      %65 = sbr.rel target = $region37
    $region36: #{tpu_custom_call.1} parent=1 // pred_region
      %66 = sst [smem:[#allocation13]] [#allocation12]
      %67 = sst [smem:[#allocation14]] [#allocation11]
    $region37: #{tpu_custom_call.1} parent=1 // pred_fallthru
      _
    %69 = shalt.err (0)
    %s71 = sshll.u32 [#allocation2], 4
    %s72 = int_to_ptr.vmem [resolvable:$true] %s71
    %74 = dma.hbm_to_vmem [thread:$0]  %s0, 1024, %s72, [#allocation3]
    %v75 = vld [vmem:[%s3] sm:$0x1]
    %v76 = vld [vmem:[%s5] sm:$0x1]
    %v77 = vld [vmem:[%s5 + $0x1] sm:$0x1]
    %v78 = vld [vmem:[%s5 + $0x2] sm:$0x1]
    %v79 = vld [vmem:[%s5 + $0x3] sm:$0x1]
    %v80 = vld [vmem:[#allocation4] sm:$0xf]
    %v81 = vld [vmem:[#allocation4 + $0x4] sm:$0xf]
    %v82 = vld [vmem:[#allocation4 + $0x8] sm:$0xf]
    %v83 = vld [vmem:[#allocation4 + $0xc] sm:$0xf]
    %v84 = vld [vmem:[#allocation4 + $0x10] sm:$0xf]
    %v85 = vld [vmem:[#allocation4 + $0x14] sm:$0xf]
    %v86 = vld [vmem:[#allocation4 + $0x18] sm:$0xf]
    %v87 = vld [vmem:[#allocation4 + $0x1c] sm:$0xf]
    %v88 = vld [vmem:[#allocation4 + $0x20] sm:$0xf]
    %v89 = vld [vmem:[#allocation4 + $0x24] sm:$0xf]
    %v90 = vld [vmem:[#allocation4 + $0x28] sm:$0xf]
    %v91 = vld [vmem:[#allocation4 + $0x2c] sm:$0xf]
    %v92 = vld [vmem:[#allocation4 + $0x30] sm:$0xf]
    %v93 = vld [vmem:[#allocation4 + $0x34] sm:$0xf]
    %v94 = vld [vmem:[#allocation4 + $0x38] sm:$0xf]
    %v95 = vld [vmem:[#allocation4 + $0x3c] sm:$0xf]
    %v96 = vld [vmem:[#allocation7] sm:$0xf]
    %v97 = vld [vmem:[#allocation7 + $0x4] sm:$0xf]
    %v98 = vld [vmem:[#allocation7 + $0x8] sm:$0xf]
    %v99 = vld [vmem:[#allocation7 + $0xc] sm:$0xf]
    %v100 = vld [vmem:[#allocation7 + $0x10] sm:$0xf]
    %v101 = vld [vmem:[#allocation7 + $0x14] sm:$0xf]
    %v102 = vld [vmem:[#allocation7 + $0x18] sm:$0xf]
    %v103 = vld [vmem:[#allocation7 + $0x1c] sm:$0xf]
    %v104 = vld [vmem:[#allocation7 + $0x20] sm:$0xf]
    %v105 = vld [vmem:[#allocation7 + $0x24] sm:$0xf]
    %v106 = vld [vmem:[#allocation7 + $0x28] sm:$0xf]
    %v107 = vld [vmem:[#allocation7 + $0x2c] sm:$0xf]
    %v108 = vld [vmem:[#allocation7 + $0x30] sm:$0xf]
    %v109 = vld [vmem:[#allocation7 + $0x34] sm:$0xf]
    %v110 = vld [vmem:[#allocation7 + $0x38] sm:$0xf]
    %v111 = vld [vmem:[#allocation7 + $0x3c] sm:$0xf]
    %v128 = vunpack.c.l.b16 %v80
    %v129 = vunpack.c.l.b16 %v81
    %v130 = vunpack.c.l.b16 %v82
    %v131 = vunpack.c.l.b16 %v83
    %v132 = vunpack.c.l.b16 %v84
    %v133 = vunpack.c.l.b16 %v85
    %v134 = vunpack.c.l.b16 %v86
    %v135 = vunpack.c.l.b16 %v87
    %v136 = vunpack.c.l.b16 %v88
    %v137 = vunpack.c.l.b16 %v89
    %v138 = vunpack.c.l.b16 %v90
    %v139 = vunpack.c.l.b16 %v91
    %v140 = vunpack.c.l.b16 %v92
    %v141 = vunpack.c.l.b16 %v93
    %v142 = vunpack.c.l.b16 %v94
    %v143 = vunpack.c.l.b16 %v95
    %v144 = vpack.c.b16 %v129, %v128
    %v145 = vpack.c.b16 %v131, %v130
    %v146 = vpack.c.b16 %v133, %v132
    %v147 = vpack.c.b16 %v135, %v134
    %v148 = vpack.c.b16 %v137, %v136
    %v149 = vpack.c.b16 %v139, %v138
    %v150 = vpack.c.b16 %v141, %v140
    %v151 = vpack.c.b16 %v143, %v142
    %v176 = vunpack.c.l.b16 %v96
    %v177 = vunpack.c.l.b16 %v97
    %v178 = vunpack.c.l.b16 %v98
    %v179 = vunpack.c.l.b16 %v99
    %v180 = vunpack.c.l.b16 %v100
    %v181 = vunpack.c.l.b16 %v101
    %v182 = vunpack.c.l.b16 %v102
    %v183 = vunpack.c.l.b16 %v103
    %v184 = vunpack.c.l.b16 %v104
    %v185 = vunpack.c.l.b16 %v105
    %v186 = vunpack.c.l.b16 %v106
    %v187 = vunpack.c.l.b16 %v107
    %v188 = vunpack.c.l.b16 %v108
    %v189 = vunpack.c.l.b16 %v109
    %v190 = vunpack.c.l.b16 %v110
    %v191 = vunpack.c.l.b16 %v111
    %v192 = vpack.c.b16 %v177, %v176
    %v193 = vpack.c.b16 %v179, %v178
    %v194 = vpack.c.b16 %v181, %v180
    %v195 = vpack.c.b16 %v183, %v182
    %v196 = vpack.c.b16 %v185, %v184
    %v197 = vpack.c.b16 %v187, %v186
    %v198 = vpack.c.b16 %v189, %v188
    %v199 = vpack.c.b16 %v191, %v190
    %208 = vmatprep.subr.bf16.mxu0 0
    %209 = vmatpush1.bf16.msra.mxu0 %v192
    %210 = vmatprep.subr.bf16.mxu0 0
    %211 = vmatpush1.bf16.msra.mxu0 %v193
    %212 = vmatprep.subr.bf16.mxu0 0
    %213 = vmatpush1.bf16.msra.mxu0 %v194
    %214 = vmatprep.subr.bf16.mxu0 0
    %215 = vmatpush1.bf16.msra.mxu0 %v195
    %216 = vmatprep.subr.bf16.mxu0 0
    %217 = vmatpush1.bf16.msra.mxu0 %v196
    %218 = vmatprep.subr.bf16.mxu0 0
    %219 = vmatpush1.bf16.msra.mxu0 %v197
    %220 = vmatprep.subr.bf16.mxu0 0
    %221 = vmatpush1.bf16.msra.mxu0 %v198
    %222 = vmatprep.subr.bf16.mxu0 0
    %223 = vmatpush1.bf16.msra.mxu0 %v199
    %224 = vmatprep.subr.bf16.mxu0 0
    %225 = vmatpush1.bf16.msra.mxu0 0
    %226 = vmatprep.subr.bf16.mxu0 0
    %227 = vmatpush1.bf16.msra.mxu0 0
    %228 = vmatprep.subr.bf16.mxu0 0
    %229 = vmatpush1.bf16.msra.mxu0 0
    %230 = vmatprep.subr.bf16.mxu0 0
    %231 = vmatpush1.bf16.msra.mxu0 0
    %232 = vmatprep.subr.bf16.mxu0 0
    %233 = vmatpush1.bf16.msra.mxu0 0
    %234 = vmatprep.subr.bf16.mxu0 0
    %235 = vmatpush1.bf16.msra.mxu0 0
    %236 = vmatprep.subr.bf16.mxu0 0
    %237 = vmatpush1.bf16.msra.mxu0 0
    %238 = vmatprep.subr.bf16.mxu0 0
    %239 = vmatpush1.bf16.msra.mxu0 0
    %240 = vmatprep.mubr.bf16.mxu0 0
    %241 = vmatmul.mubr.bf16.gmra.mrb[0].mxu0 %v144
    %v242 = vpop.f32.mrb[0].mxu0
    %v243 = vadd.f32 0.0, %v242
    %v244 = vpop.f32.mrb[0].mxu0
    %v245 = vpop.f32.mrb[0].mxu0
    %v246 = vadd.f32 0.0, %v245
    %v247 = vpop.f32.mrb[0].mxu0
    %248 = vmatprep.mubr.bf16.mxu0 0
    %249 = vmatmul.mubr.bf16.gmra.mrb[0].mxu0 %v145
    %v250 = vpop.f32.mrb[0].mxu0
    %v251 = vadd.f32 0.0, %v250
    %v252 = vpop.f32.mrb[0].mxu0
    %v253 = vpop.f32.mrb[0].mxu0
    %v254 = vadd.f32 0.0, %v253
    %v255 = vpop.f32.mrb[0].mxu0
    %256 = vmatprep.mubr.bf16.mxu0 0
    %257 = vmatmul.mubr.bf16.gmra.mrb[0].mxu0 %v146
    %v258 = vpop.f32.mrb[0].mxu0
    %v259 = vadd.f32 0.0, %v258
    %v260 = vpop.f32.mrb[0].mxu0
    %v261 = vpop.f32.mrb[0].mxu0
    %v262 = vadd.f32 0.0, %v261
    %v263 = vpop.f32.mrb[0].mxu0
    %264 = vmatprep.mubr.bf16.mxu0 0
    %265 = vmatmul.mubr.bf16.gmra.mrb[0].mxu0 %v147
    %v266 = vpop.f32.mrb[0].mxu0
    %v267 = vadd.f32 0.0, %v266
    %v268 = vpop.f32.mrb[0].mxu0
    %v269 = vpop.f32.mrb[0].mxu0
    %v270 = vadd.f32 0.0, %v269
    %v271 = vpop.f32.mrb[0].mxu0
    %272 = vmatprep.mubr.bf16.mxu0 0
    %273 = vmatmul.mubr.bf16.gmra.mrb[0].mxu0 %v148
    %v274 = vpop.f32.mrb[0].mxu0
    %v275 = vadd.f32 0.0, %v274
    %v276 = vpop.f32.mrb[0].mxu0
    %v277 = vpop.f32.mrb[0].mxu0
    %v278 = vadd.f32 0.0, %v277
    %v279 = vpop.f32.mrb[0].mxu0
    %280 = vmatprep.mubr.bf16.mxu0 0
    %281 = vmatmul.mubr.bf16.gmra.mrb[0].mxu0 %v149
    %v282 = vpop.f32.mrb[0].mxu0
    %v283 = vadd.f32 0.0, %v282
    %v284 = vpop.f32.mrb[0].mxu0
    %v285 = vpop.f32.mrb[0].mxu0
    %v286 = vadd.f32 0.0, %v285
    %v287 = vpop.f32.mrb[0].mxu0
    %288 = vmatprep.mubr.bf16.mxu0 0
    %289 = vmatmul.mubr.bf16.gmra.mrb[0].mxu0 %v150
    %v290 = vpop.f32.mrb[0].mxu0
    %v291 = vadd.f32 0.0, %v290
    %v292 = vpop.f32.mrb[0].mxu0
    %v293 = vpop.f32.mrb[0].mxu0
    %v294 = vadd.f32 0.0, %v293
    %v295 = vpop.f32.mrb[0].mxu0
    %296 = vmatprep.mubr.bf16.mxu0 0
    %297 = vmatmul.mubr.bf16.gmra.mrb[0].mxu0 %v151
    %v298 = vpop.f32.mrb[0].mxu0
    %v299 = vadd.f32 0.0, %v298
    %v300 = vpop.f32.mrb[0].mxu0
    %v301 = vpop.f32.mrb[0].mxu0
    %v302 = vadd.f32 0.0, %v301
    %v303 = vpop.f32.mrb[0].mxu0
    %304 = vdwg.mxu0
    %v305 = vpack.c.bf16 %v246, %v243
    %v306 = vpack.c.bf16 %v254, %v251
    %v307 = vpack.c.bf16 %v262, %v259
    %v308 = vpack.c.bf16 %v270, %v267
    %v309 = vpack.c.bf16 %v278, %v275
    %v310 = vpack.c.bf16 %v286, %v283
    %v311 = vpack.c.bf16 %v294, %v291
    %v312 = vpack.c.bf16 %v302, %v299
    %s313 = smul.u32 4, 16
    %s314 = smul.u32 %s313, 1
    %s315 = sshll.u32 %s314, 4
    %316 = dma.done [#allocation3], %s315
    %v317 = vld [vmem:[#allocation2] sm:$0xff]
    %v318 = vld [vmem:[#allocation2 + $0x8] sm:$0xff]
    %v319 = vld [vmem:[#allocation2 + $0x10] sm:$0xff]
    %v320 = vld [vmem:[#allocation2 + $0x18] sm:$0xff]
    %v321 = vld [vmem:[#allocation2 + $0x20] sm:$0xff]
    %v322 = vld [vmem:[#allocation2 + $0x28] sm:$0xff]
    %v323 = vld [vmem:[#allocation2 + $0x30] sm:$0xff]
    %v324 = vld [vmem:[#allocation2 + $0x38] sm:$0xff]
    %v326 = vlaneseq
    %v327 = vshrl.u32 %v326, 7
    %v328 = vsub.s32 0, %v327
    %v329 = vrot.slane %v75, %v328
    %331 = vmatprep.subr.bf16.mxu0 0
    %332 = vmatpush1.bf16.msra.mxu0 %v305
    %333 = vmatprep.subr.bf16.mxu0 0
    %334 = vmatpush1.bf16.msra.mxu0 %v306
    %335 = vmatprep.subr.bf16.mxu0 0
    %336 = vmatpush1.bf16.msra.mxu0 %v307
    %337 = vmatprep.subr.bf16.mxu0 0
    %338 = vmatpush1.bf16.msra.mxu0 %v308
    %339 = vmatprep.subr.bf16.mxu0 0
    %340 = vmatpush1.bf16.msra.mxu0 %v309
    %341 = vmatprep.subr.bf16.mxu0 0
    %342 = vmatpush1.bf16.msra.mxu0 %v310
    %343 = vmatprep.subr.bf16.mxu0 0
    %344 = vmatpush1.bf16.msra.mxu0 %v311
    %345 = vmatprep.subr.bf16.mxu0 0
    %346 = vmatpush1.bf16.msra.mxu0 %v312
    %347 = vmatprep.subr.bf16.mxu0 0
    %348 = vmatpush1.bf16.msra.mxu0 0
    %349 = vmatprep.subr.bf16.mxu0 0
    %350 = vmatpush1.bf16.msra.mxu0 0
    %351 = vmatprep.subr.bf16.mxu0 0
    %352 = vmatpush1.bf16.msra.mxu0 0
    %353 = vmatprep.subr.bf16.mxu0 0
    %354 = vmatpush1.bf16.msra.mxu0 0
    %355 = vmatprep.subr.bf16.mxu0 0
    %356 = vmatpush1.bf16.msra.mxu0 0
    %357 = vmatprep.subr.bf16.mxu0 0
    %358 = vmatpush1.bf16.msra.mxu0 0
    %359 = vmatprep.subr.bf16.mxu0 0
    %360 = vmatpush1.bf16.msra.mxu0 0
    %361 = vmatprep.subr.bf16.mxu0 0
    %362 = vmatpush1.bf16.msra.mxu0 0
    %363 = vmatprep.mubr.bf16.mxu0 0
    %364 = vmatmul.mubr.bf16.gmra.mrb[0].mxu0 %v317
    %v365 = vpop.f32.mrb[0].mxu0
    %v366 = vadd.f32 %v329, %v365
    %v367 = vpop.f32.mrb[0].mxu0
    %v368 = vpop.f32.mrb[0].mxu0
    %v369 = vadd.f32 %v329, %v368
    %v370 = vpop.f32.mrb[0].mxu0
    %371 = vmatprep.mubr.bf16.mxu0 0
    %372 = vmatmul.mubr.bf16.gmra.mrb[0].mxu0 %v318
    %v373 = vpop.f32.mrb[0].mxu0
    %v374 = vadd.f32 %v329, %v373
    %v375 = vpop.f32.mrb[0].mxu0
    %v376 = vpop.f32.mrb[0].mxu0
    %v377 = vadd.f32 %v329, %v376
    %v378 = vpop.f32.mrb[0].mxu0
    %379 = vmatprep.mubr.bf16.mxu0 0
    %380 = vmatmul.mubr.bf16.gmra.mrb[0].mxu0 %v319
    %v381 = vpop.f32.mrb[0].mxu0
    %v382 = vadd.f32 %v329, %v381
    %v383 = vpop.f32.mrb[0].mxu0
    %v384 = vpop.f32.mrb[0].mxu0
    %v385 = vadd.f32 %v329, %v384
    %v386 = vpop.f32.mrb[0].mxu0
    %387 = vmatprep.mubr.bf16.mxu0 0
    %388 = vmatmul.mubr.bf16.gmra.mrb[0].mxu0 %v320
    %v389 = vpop.f32.mrb[0].mxu0
    %v390 = vadd.f32 %v329, %v389
    %v391 = vpop.f32.mrb[0].mxu0
    %v392 = vpop.f32.mrb[0].mxu0
    %v393 = vadd.f32 %v329, %v392
    %v394 = vpop.f32.mrb[0].mxu0
    %395 = vmatprep.mubr.bf16.mxu0 0
    %396 = vmatmul.mubr.bf16.gmra.mrb[0].mxu0 %v321
    %v397 = vpop.f32.mrb[0].mxu0
    %v398 = vadd.f32 %v329, %v397
    %v399 = vpop.f32.mrb[0].mxu0
    %v400 = vpop.f32.mrb[0].mxu0
    %v401 = vadd.f32 %v329, %v400
    %v402 = vpop.f32.mrb[0].mxu0
    %403 = vmatprep.mubr.bf16.mxu0 0
    %404 = vmatmul.mubr.bf16.gmra.mrb[0].mxu0 %v322
    %v405 = vpop.f32.mrb[0].mxu0
    %v406 = vadd.f32 %v329, %v405
    %v407 = vpop.f32.mrb[0].mxu0
    %v408 = vpop.f32.mrb[0].mxu0
    %v409 = vadd.f32 %v329, %v408
    %v410 = vpop.f32.mrb[0].mxu0
    %411 = vmatprep.mubr.bf16.mxu0 0
    %412 = vmatmul.mubr.bf16.gmra.mrb[0].mxu0 %v323
    %v413 = vpop.f32.mrb[0].mxu0
    %v414 = vadd.f32 %v329, %v413
    %v415 = vpop.f32.mrb[0].mxu0
    %v416 = vpop.f32.mrb[0].mxu0
    %v417 = vadd.f32 %v329, %v416
    %v418 = vpop.f32.mrb[0].mxu0
    %419 = vmatprep.mubr.bf16.mxu0 0
    %420 = vmatmul.mubr.bf16.gmra.mrb[0].mxu0 %v324
    %v421 = vpop.f32.mrb[0].mxu0
    %v422 = vadd.f32 %v329, %v421
    %v423 = vpop.f32.mrb[0].mxu0
    %v424 = vpop.f32.mrb[0].mxu0
    %v425 = vadd.f32 %v329, %v424
    %v426 = vpop.f32.mrb[0].mxu0
    %427 = vdwg.mxu0
    %v428 = vmax.f32 %v366, 0.0
    %v429 = vmax.f32 %v369, 0.0
    %v430 = vmax.f32 %v374, 0.0
    %v431 = vmax.f32 %v377, 0.0
    %v432 = vmax.f32 %v382, 0.0
    %v433 = vmax.f32 %v385, 0.0
    %v434 = vmax.f32 %v390, 0.0
    %v435 = vmax.f32 %v393, 0.0
    %v436 = vmax.f32 %v398, 0.0
    %v437 = vmax.f32 %v401, 0.0
    %v438 = vmax.f32 %v406, 0.0
    %v439 = vmax.f32 %v409, 0.0
    %v440 = vmax.f32 %v414, 0.0
    %v441 = vmax.f32 %v417, 0.0
    %v442 = vmax.f32 %v422, 0.0
    %v443 = vmax.f32 %v425, 0.0
    %v444 = vpack.c.bf16 %v429, %v428
    %v445 = vpack.c.bf16 %v431, %v430
    %v446 = vpack.c.bf16 %v433, %v432
    %v447 = vpack.c.bf16 %v435, %v434
    %v448 = vpack.c.bf16 %v437, %v436
    %v449 = vpack.c.bf16 %v439, %v438
    %v450 = vpack.c.bf16 %v441, %v440
    %v451 = vpack.c.bf16 %v443, %v442
    %v452 = vld [vmem:[#allocation9] sm:$0xf]
    %v453 = vld [vmem:[#allocation9 + $0x4] sm:$0xf]
    %v454 = vld [vmem:[#allocation9 + $0x8] sm:$0xf]
    %v455 = vld [vmem:[#allocation9 + $0xc] sm:$0xf]
    %v456 = vld [vmem:[#allocation9 + $0x10] sm:$0xf]
    %v457 = vld [vmem:[#allocation9 + $0x14] sm:$0xf]
    %v458 = vld [vmem:[#allocation9 + $0x18] sm:$0xf]
    %v459 = vld [vmem:[#allocation9 + $0x1c] sm:$0xf]
    %v460 = vld [vmem:[#allocation9 + $0x20] sm:$0xf]
    %v461 = vld [vmem:[#allocation9 + $0x24] sm:$0xf]
    %v462 = vld [vmem:[#allocation9 + $0x28] sm:$0xf]
    %v463 = vld [vmem:[#allocation9 + $0x2c] sm:$0xf]
    %v464 = vld [vmem:[#allocation9 + $0x30] sm:$0xf]
    %v465 = vld [vmem:[#allocation9 + $0x34] sm:$0xf]
    %v466 = vld [vmem:[#allocation9 + $0x38] sm:$0xf]
    %v467 = vld [vmem:[#allocation9 + $0x3c] sm:$0xf]
    %v484 = vunpack.c.l.b16 %v452
    %v485 = vunpack.c.l.b16 %v453
    %v486 = vunpack.c.l.b16 %v454
    %v487 = vunpack.c.l.b16 %v455
    %v488 = vunpack.c.l.b16 %v456
    %v489 = vunpack.c.l.b16 %v457
    %v490 = vunpack.c.l.b16 %v458
    %v491 = vunpack.c.l.b16 %v459
    %v492 = vunpack.c.l.b16 %v460
    %v493 = vunpack.c.l.b16 %v461
    %v494 = vunpack.c.l.b16 %v462
    %v495 = vunpack.c.l.b16 %v463
    %v496 = vunpack.c.l.b16 %v464
    %v497 = vunpack.c.l.b16 %v465
    %v498 = vunpack.c.l.b16 %v466
    %v499 = vunpack.c.l.b16 %v467
    %v500 = vpack.c.b16 %v485, %v484
    %v501 = vpack.c.b16 %v487, %v486
    %v502 = vpack.c.b16 %v489, %v488
    %v503 = vpack.c.b16 %v491, %v490
    %v504 = vpack.c.b16 %v493, %v492
    %v505 = vpack.c.b16 %v495, %v494
    %v506 = vpack.c.b16 %v497, %v496
    %v507 = vpack.c.b16 %v499, %v498
    %516 = vmatprep.subr.bf16.mxu0 0
    %517 = vmatpush1.bf16.msra.mxu0 %v500
    %518 = vmatprep.subr.bf16.mxu0 0
    %519 = vmatpush1.bf16.msra.mxu0 %v501
    %520 = vmatprep.subr.bf16.mxu0 0
    %521 = vmatpush1.bf16.msra.mxu0 %v502
    %522 = vmatprep.subr.bf16.mxu0 0
    %523 = vmatpush1.bf16.msra.mxu0 %v503
    %524 = vmatprep.subr.bf16.mxu0 0
    %525 = vmatpush1.bf16.msra.mxu0 %v504
    %526 = vmatprep.subr.bf16.mxu0 0
    %527 = vmatpush1.bf16.msra.mxu0 %v505
    %528 = vmatprep.subr.bf16.mxu0 0
    %529 = vmatpush1.bf16.msra.mxu0 %v506
    %530 = vmatprep.subr.bf16.mxu0 0
    %531 = vmatpush1.bf16.msra.mxu0 %v507
    %532 = vmatprep.subr.bf16.mxu0 0
    %533 = vmatpush1.bf16.msra.mxu0 0
    %534 = vmatprep.subr.bf16.mxu0 0
    %535 = vmatpush1.bf16.msra.mxu0 0
    %536 = vmatprep.subr.bf16.mxu0 0
    %537 = vmatpush1.bf16.msra.mxu0 0
    %538 = vmatprep.subr.bf16.mxu0 0
    %539 = vmatpush1.bf16.msra.mxu0 0
    %540 = vmatprep.subr.bf16.mxu0 0
    %541 = vmatpush1.bf16.msra.mxu0 0
    %542 = vmatprep.subr.bf16.mxu0 0
    %543 = vmatpush1.bf16.msra.mxu0 0
    %544 = vmatprep.subr.bf16.mxu0 0
    %545 = vmatpush1.bf16.msra.mxu0 0
    %546 = vmatprep.subr.bf16.mxu0 0
    %547 = vmatpush1.bf16.msra.mxu0 0
    %548 = vmatprep.mubr.bf16.mxu0 0
    %549 = vmatmul.mubr.bf16.gmra.mrb[0].mxu0 %v444
    %v550 = vpop.f32.mrb[0].mxu0
    %v551 = vadd.f32 0.0, %v550
    %v552 = vpop.f32.mrb[0].mxu0
    %v553 = vpop.f32.mrb[0].mxu0
    %v554 = vadd.f32 0.0, %v553
    %v555 = vpop.f32.mrb[0].mxu0
    %556 = vmatprep.mubr.bf16.mxu0 0
    %557 = vmatmul.mubr.bf16.gmra.mrb[0].mxu0 %v445
    %v558 = vpop.f32.mrb[0].mxu0
    %v559 = vadd.f32 0.0, %v558
    %v560 = vpop.f32.mrb[0].mxu0
    %v561 = vpop.f32.mrb[0].mxu0
    %v562 = vadd.f32 0.0, %v561
    %v563 = vpop.f32.mrb[0].mxu0
    %564 = vmatprep.mubr.bf16.mxu0 0
    %565 = vmatmul.mubr.bf16.gmra.mrb[0].mxu0 %v446
    %v566 = vpop.f32.mrb[0].mxu0
    %v567 = vadd.f32 0.0, %v566
    %v568 = vpop.f32.mrb[0].mxu0
    %v569 = vpop.f32.mrb[0].mxu0
    %v570 = vadd.f32 0.0, %v569
    %v571 = vpop.f32.mrb[0].mxu0
    %572 = vmatprep.mubr.bf16.mxu0 0
    %573 = vmatmul.mubr.bf16.gmra.mrb[0].mxu0 %v447
    %v574 = vpop.f32.mrb[0].mxu0
    %v575 = vadd.f32 0.0, %v574
    %v576 = vpop.f32.mrb[0].mxu0
    %v577 = vpop.f32.mrb[0].mxu0
    %v578 = vadd.f32 0.0, %v577
    %v579 = vpop.f32.mrb[0].mxu0
    %580 = vmatprep.mubr.bf16.mxu0 0
    %581 = vmatmul.mubr.bf16.gmra.mrb[0].mxu0 %v448
    %v582 = vpop.f32.mrb[0].mxu0
    %v583 = vadd.f32 0.0, %v582
    %v584 = vpop.f32.mrb[0].mxu0
    %v585 = vpop.f32.mrb[0].mxu0
    %v586 = vadd.f32 0.0, %v585
    %v587 = vpop.f32.mrb[0].mxu0
    %588 = vmatprep.mubr.bf16.mxu0 0
    %589 = vmatmul.mubr.bf16.gmra.mrb[0].mxu0 %v449
    %v590 = vpop.f32.mrb[0].mxu0
    %v591 = vadd.f32 0.0, %v590
    %v592 = vpop.f32.mrb[0].mxu0
    %v593 = vpop.f32.mrb[0].mxu0
    %v594 = vadd.f32 0.0, %v593
    %v595 = vpop.f32.mrb[0].mxu0
    %596 = vmatprep.mubr.bf16.mxu0 0
    %597 = vmatmul.mubr.bf16.gmra.mrb[0].mxu0 %v450
    %v598 = vpop.f32.mrb[0].mxu0
    %v599 = vadd.f32 0.0, %v598
    %v600 = vpop.f32.mrb[0].mxu0
    %v601 = vpop.f32.mrb[0].mxu0
    %v602 = vadd.f32 0.0, %v601
    %v603 = vpop.f32.mrb[0].mxu0
    %604 = vmatprep.mubr.bf16.mxu0 0
    %605 = vmatmul.mubr.bf16.gmra.mrb[0].mxu0 %v451
    %v606 = vpop.f32.mrb[0].mxu0
    %v607 = vadd.f32 0.0, %v606
    %v608 = vpop.f32.mrb[0].mxu0
    %v609 = vpop.f32.mrb[0].mxu0
    %v610 = vadd.f32 0.0, %v609
    %v611 = vpop.f32.mrb[0].mxu0
    %612 = vdwg.mxu0
    %v613 = vpack.c.bf16 %v554, %v551
    %v614 = vpack.c.bf16 %v562, %v559
    %v615 = vpack.c.bf16 %v570, %v567
    %v616 = vpack.c.bf16 %v578, %v575
    %v617 = vpack.c.bf16 %v586, %v583
    %v618 = vpack.c.bf16 %v594, %v591
    %v619 = vpack.c.bf16 %v602, %v599
    %v620 = vpack.c.bf16 %v610, %v607
    %v622 = vlaneseq
    %v623 = vshrl.u32 %v622, 7
    %v624 = vsub.s32 0, %v623
    %v625 = vrot.slane %v76, %v624
    %627 = vmatprep.subr.bf16.mxu0 0
    %628 = vmatpush1.bf16.msra.mxu0 %v613
    %629 = vmatprep.subr.bf16.mxu0 0
    %630 = vmatpush1.bf16.msra.mxu0 %v614
    %631 = vmatprep.subr.bf16.mxu0 0
    %632 = vmatpush1.bf16.msra.mxu0 %v615
    %633 = vmatprep.subr.bf16.mxu0 0
    %634 = vmatpush1.bf16.msra.mxu0 %v616
    %635 = vmatprep.subr.bf16.mxu0 0
    %636 = vmatpush1.bf16.msra.mxu0 %v617
    %637 = vmatprep.subr.bf16.mxu0 0
    %638 = vmatpush1.bf16.msra.mxu0 %v618
    %639 = vmatprep.subr.bf16.mxu0 0
    %640 = vmatpush1.bf16.msra.mxu0 %v619
    %641 = vmatprep.subr.bf16.mxu0 0
    %642 = vmatpush1.bf16.msra.mxu0 %v620
    %643 = vmatprep.subr.bf16.mxu0 0
    %644 = vmatpush1.bf16.msra.mxu0 0
    %645 = vmatprep.subr.bf16.mxu0 0
    %646 = vmatpush1.bf16.msra.mxu0 0
    %647 = vmatprep.subr.bf16.mxu0 0
    %648 = vmatpush1.bf16.msra.mxu0 0
    %649 = vmatprep.subr.bf16.mxu0 0
    %650 = vmatpush1.bf16.msra.mxu0 0
    %651 = vmatprep.subr.bf16.mxu0 0
    %652 = vmatpush1.bf16.msra.mxu0 0
    %653 = vmatprep.subr.bf16.mxu0 0
    %654 = vmatpush1.bf16.msra.mxu0 0
    %655 = vmatprep.subr.bf16.mxu0 0
    %656 = vmatpush1.bf16.msra.mxu0 0
    %657 = vmatprep.subr.bf16.mxu0 0
    %658 = vmatpush1.bf16.msra.mxu0 0
    %659 = vmatprep.mubr.bf16.mxu0 0
    %660 = vmatmul.mubr.bf16.gmra.mrb[0].mxu0 %v317
    %v661 = vpop.f32.mrb[0].mxu0
    %v662 = vadd.f32 %v625, %v661
    %v663 = vpop.f32.mrb[0].mxu0
    %v664 = vpop.f32.mrb[0].mxu0
    %v665 = vadd.f32 %v625, %v664
    %v666 = vpop.f32.mrb[0].mxu0
    %667 = vmatprep.mubr.bf16.mxu0 0
    %668 = vmatmul.mubr.bf16.gmra.mrb[0].mxu0 %v318
    %v669 = vpop.f32.mrb[0].mxu0
    %v670 = vadd.f32 %v625, %v669
    %v671 = vpop.f32.mrb[0].mxu0
    %v672 = vpop.f32.mrb[0].mxu0
    %v673 = vadd.f32 %v625, %v672
    %v674 = vpop.f32.mrb[0].mxu0
    %675 = vmatprep.mubr.bf16.mxu0 0
    %676 = vmatmul.mubr.bf16.gmra.mrb[0].mxu0 %v319
    %v677 = vpop.f32.mrb[0].mxu0
    %v678 = vadd.f32 %v625, %v677
    %v679 = vpop.f32.mrb[0].mxu0
    %v680 = vpop.f32.mrb[0].mxu0
    %v681 = vadd.f32 %v625, %v680
    %v682 = vpop.f32.mrb[0].mxu0
    %683 = vmatprep.mubr.bf16.mxu0 0
    %684 = vmatmul.mubr.bf16.gmra.mrb[0].mxu0 %v320
    %v685 = vpop.f32.mrb[0].mxu0
    %v686 = vadd.f32 %v625, %v685
    %v687 = vpop.f32.mrb[0].mxu0
    %v688 = vpop.f32.mrb[0].mxu0
    %v689 = vadd.f32 %v625, %v688
    %v690 = vpop.f32.mrb[0].mxu0
    %691 = vmatprep.mubr.bf16.mxu0 0
    %692 = vmatmul.mubr.bf16.gmra.mrb[0].mxu0 %v321
    %v693 = vpop.f32.mrb[0].mxu0
    %v694 = vadd.f32 %v625, %v693
    %v695 = vpop.f32.mrb[0].mxu0
    %v696 = vpop.f32.mrb[0].mxu0
    %v697 = vadd.f32 %v625, %v696
    %v698 = vpop.f32.mrb[0].mxu0
    %699 = vmatprep.mubr.bf16.mxu0 0
    %700 = vmatmul.mubr.bf16.gmra.mrb[0].mxu0 %v322
    %v701 = vpop.f32.mrb[0].mxu0
    %v702 = vadd.f32 %v625, %v701
    %v703 = vpop.f32.mrb[0].mxu0
    %v704 = vpop.f32.mrb[0].mxu0
    %v705 = vadd.f32 %v625, %v704
    %v706 = vpop.f32.mrb[0].mxu0
    %707 = vmatprep.mubr.bf16.mxu0 0
    %708 = vmatmul.mubr.bf16.gmra.mrb[0].mxu0 %v323
    %v709 = vpop.f32.mrb[0].mxu0
    %v710 = vadd.f32 %v625, %v709
    %v711 = vpop.f32.mrb[0].mxu0
    %v712 = vpop.f32.mrb[0].mxu0
    %v713 = vadd.f32 %v625, %v712
    %v714 = vpop.f32.mrb[0].mxu0
    %715 = vmatprep.mubr.bf16.mxu0 0
    %716 = vmatmul.mubr.bf16.gmra.mrb[0].mxu0 %v324
    %v717 = vpop.f32.mrb[0].mxu0
    %v718 = vadd.f32 %v625, %v717
    %v719 = vpop.f32.mrb[0].mxu0
    %v720 = vpop.f32.mrb[0].mxu0
    %v721 = vadd.f32 %v625, %v720
    %v722 = vpop.f32.mrb[0].mxu0
    %723 = vdwg.mxu0
    %v724 = vmax.f32 %v662, 0.0
    %v725 = vmax.f32 %v665, 0.0
    %v726 = vmax.f32 %v670, 0.0
    %v727 = vmax.f32 %v673, 0.0
    %v728 = vmax.f32 %v678, 0.0
    %v729 = vmax.f32 %v681, 0.0
    %v730 = vmax.f32 %v686, 0.0
    %v731 = vmax.f32 %v689, 0.0
    %v732 = vmax.f32 %v694, 0.0
    %v733 = vmax.f32 %v697, 0.0
    %v734 = vmax.f32 %v702, 0.0
    %v735 = vmax.f32 %v705, 0.0
    %v736 = vmax.f32 %v710, 0.0
    %v737 = vmax.f32 %v713, 0.0
    %v738 = vmax.f32 %v718, 0.0
    %v739 = vmax.f32 %v721, 0.0
    %v740 = vpack.c.bf16 %v725, %v724
    %v741 = vpack.c.bf16 %v727, %v726
    %v742 = vpack.c.bf16 %v729, %v728
    %v743 = vpack.c.bf16 %v731, %v730
    %v744 = vpack.c.bf16 %v733, %v732
    %v745 = vpack.c.bf16 %v735, %v734
    %v746 = vpack.c.bf16 %v737, %v736
    %v747 = vpack.c.bf16 %v739, %v738
    %s748 = scalar_lea.vmem [#allocation9], 64
    %v749 = vld [vmem:[%s748] sm:$0xf]
    %v750 = vld [vmem:[%s748 + $0x4] sm:$0xf]
    %v751 = vld [vmem:[%s748 + $0x8] sm:$0xf]
    %v752 = vld [vmem:[%s748 + $0xc] sm:$0xf]
    %v753 = vld [vmem:[%s748 + $0x10] sm:$0xf]
    %v754 = vld [vmem:[%s748 + $0x14] sm:$0xf]
    %v755 = vld [vmem:[%s748 + $0x18] sm:$0xf]
    %v756 = vld [vmem:[%s748 + $0x1c] sm:$0xf]
    %v757 = vld [vmem:[%s748 + $0x20] sm:$0xf]
    %v758 = vld [vmem:[%s748 + $0x24] sm:$0xf]
    %v759 = vld [vmem:[%s748 + $0x28] sm:$0xf]
    %v760 = vld [vmem:[%s748 + $0x2c] sm:$0xf]
    %v761 = vld [vmem:[%s748 + $0x30] sm:$0xf]
    %v762 = vld [vmem:[%s748 + $0x34] sm:$0xf]
    %v763 = vld [vmem:[%s748 + $0x38] sm:$0xf]
    %v764 = vld [vmem:[%s748 + $0x3c] sm:$0xf]
    %v781 = vunpack.c.l.b16 %v749
    %v782 = vunpack.c.l.b16 %v750
    %v783 = vunpack.c.l.b16 %v751
    %v784 = vunpack.c.l.b16 %v752
    %v785 = vunpack.c.l.b16 %v753
    %v786 = vunpack.c.l.b16 %v754
    %v787 = vunpack.c.l.b16 %v755
    %v788 = vunpack.c.l.b16 %v756
    %v789 = vunpack.c.l.b16 %v757
    %v790 = vunpack.c.l.b16 %v758
    %v791 = vunpack.c.l.b16 %v759
    %v792 = vunpack.c.l.b16 %v760
    %v793 = vunpack.c.l.b16 %v761
    %v794 = vunpack.c.l.b16 %v762
    %v795 = vunpack.c.l.b16 %v763
    %v796 = vunpack.c.l.b16 %v764
    %v797 = vpack.c.b16 %v782, %v781
    %v798 = vpack.c.b16 %v784, %v783
    %v799 = vpack.c.b16 %v786, %v785
    %v800 = vpack.c.b16 %v788, %v787
    %v801 = vpack.c.b16 %v790, %v789
    %v802 = vpack.c.b16 %v792, %v791
    %v803 = vpack.c.b16 %v794, %v793
    %v804 = vpack.c.b16 %v796, %v795
    %813 = vmatprep.subr.bf16.mxu0 0
    %814 = vmatpush1.bf16.msra.mxu0 %v797
    %815 = vmatprep.subr.bf16.mxu0 0
    %816 = vmatpush1.bf16.msra.mxu0 %v798
    %817 = vmatprep.subr.bf16.mxu0 0
    %818 = vmatpush1.bf16.msra.mxu0 %v799
    %819 = vmatprep.subr.bf16.mxu0 0
    %820 = vmatpush1.bf16.msra.mxu0 %v800
    %821 = vmatprep.subr.bf16.mxu0 0
    %822 = vmatpush1.bf16.msra.mxu0 %v801
    %823 = vmatprep.subr.bf16.mxu0 0
    %824 = vmatpush1.bf16.msra.mxu0 %v802
    %825 = vmatprep.subr.bf16.mxu0 0
    %826 = vmatpush1.bf16.msra.mxu0 %v803
    %827 = vmatprep.subr.bf16.mxu0 0
    %828 = vmatpush1.bf16.msra.mxu0 %v804
    %829 = vmatprep.subr.bf16.mxu0 0
    %830 = vmatpush1.bf16.msra.mxu0 0
    %831 = vmatprep.subr.bf16.mxu0 0
    %832 = vmatpush1.bf16.msra.mxu0 0
    %833 = vmatprep.subr.bf16.mxu0 0
    %834 = vmatpush1.bf16.msra.mxu0 0
    %835 = vmatprep.subr.bf16.mxu0 0
    %836 = vmatpush1.bf16.msra.mxu0 0
    %837 = vmatprep.subr.bf16.mxu0 0
    %838 = vmatpush1.bf16.msra.mxu0 0
    %839 = vmatprep.subr.bf16.mxu0 0
    %840 = vmatpush1.bf16.msra.mxu0 0
    %841 = vmatprep.subr.bf16.mxu0 0
    %842 = vmatpush1.bf16.msra.mxu0 0
    %843 = vmatprep.subr.bf16.mxu0 0
    %844 = vmatpush1.bf16.msra.mxu0 0
    %845 = vmatprep.mubr.bf16.mxu0 0
    %846 = vmatmul.mubr.bf16.gmra.mrb[0].mxu0 %v740
    %v847 = vpop.f32.mrb[0].mxu0
    %v848 = vadd.f32 0.0, %v847
    %v849 = vpop.f32.mrb[0].mxu0
    %v850 = vpop.f32.mrb[0].mxu0
    %v851 = vadd.f32 0.0, %v850
    %v852 = vpop.f32.mrb[0].mxu0
    %853 = vmatprep.mubr.bf16.mxu0 0
    %854 = vmatmul.mubr.bf16.gmra.mrb[0].mxu0 %v741
    %v855 = vpop.f32.mrb[0].mxu0
    %v856 = vadd.f32 0.0, %v855
    %v857 = vpop.f32.mrb[0].mxu0
    %v858 = vpop.f32.mrb[0].mxu0
    %v859 = vadd.f32 0.0, %v858
    %v860 = vpop.f32.mrb[0].mxu0
    %861 = vmatprep.mubr.bf16.mxu0 0
    %862 = vmatmul.mubr.bf16.gmra.mrb[0].mxu0 %v742
    %v863 = vpop.f32.mrb[0].mxu0
    %v864 = vadd.f32 0.0, %v863
    %v865 = vpop.f32.mrb[0].mxu0
    %v866 = vpop.f32.mrb[0].mxu0
    %v867 = vadd.f32 0.0, %v866
    %v868 = vpop.f32.mrb[0].mxu0
    %869 = vmatprep.mubr.bf16.mxu0 0
    %870 = vmatmul.mubr.bf16.gmra.mrb[0].mxu0 %v743
    %v871 = vpop.f32.mrb[0].mxu0
    %v872 = vadd.f32 0.0, %v871
    %v873 = vpop.f32.mrb[0].mxu0
    %v874 = vpop.f32.mrb[0].mxu0
    %v875 = vadd.f32 0.0, %v874
    %v876 = vpop.f32.mrb[0].mxu0
    %877 = vmatprep.mubr.bf16.mxu0 0
    %878 = vmatmul.mubr.bf16.gmra.mrb[0].mxu0 %v744
    %v879 = vpop.f32.mrb[0].mxu0
    %v880 = vadd.f32 0.0, %v879
    %v881 = vpop.f32.mrb[0].mxu0
    %v882 = vpop.f32.mrb[0].mxu0
    %v883 = vadd.f32 0.0, %v882
    %v884 = vpop.f32.mrb[0].mxu0
    %885 = vmatprep.mubr.bf16.mxu0 0
    %886 = vmatmul.mubr.bf16.gmra.mrb[0].mxu0 %v745
    %v887 = vpop.f32.mrb[0].mxu0
    %v888 = vadd.f32 0.0, %v887
    %v889 = vpop.f32.mrb[0].mxu0
    %v890 = vpop.f32.mrb[0].mxu0
    %v891 = vadd.f32 0.0, %v890
    %v892 = vpop.f32.mrb[0].mxu0
    %893 = vmatprep.mubr.bf16.mxu0 0
    %894 = vmatmul.mubr.bf16.gmra.mrb[0].mxu0 %v746
    %v895 = vpop.f32.mrb[0].mxu0
    %v896 = vadd.f32 0.0, %v895
    %v897 = vpop.f32.mrb[0].mxu0
    %v898 = vpop.f32.mrb[0].mxu0
    %v899 = vadd.f32 0.0, %v898
    %v900 = vpop.f32.mrb[0].mxu0
    %901 = vmatprep.mubr.bf16.mxu0 0
    %902 = vmatmul.mubr.bf16.gmra.mrb[0].mxu0 %v747
    %v903 = vpop.f32.mrb[0].mxu0
    %v904 = vadd.f32 0.0, %v903
    %v905 = vpop.f32.mrb[0].mxu0
    %v906 = vpop.f32.mrb[0].mxu0
    %v907 = vadd.f32 0.0, %v906
    %v908 = vpop.f32.mrb[0].mxu0
    %909 = vdwg.mxu0
    %v910 = vpack.c.bf16 %v851, %v848
    %v911 = vpack.c.bf16 %v859, %v856
    %v912 = vpack.c.bf16 %v867, %v864
    %v913 = vpack.c.bf16 %v875, %v872
    %v914 = vpack.c.bf16 %v883, %v880
    %v915 = vpack.c.bf16 %v891, %v888
    %v916 = vpack.c.bf16 %v899, %v896
    %v917 = vpack.c.bf16 %v907, %v904
    %v919 = vlaneseq
    %v920 = vshrl.u32 %v919, 7
    %v921 = vsub.s32 0, %v920
    %v922 = vrot.slane %v77, %v921
    %924 = vmatprep.subr.bf16.mxu0 0
    %925 = vmatpush1.bf16.msra.mxu0 %v910
    %926 = vmatprep.subr.bf16.mxu0 0
    %927 = vmatpush1.bf16.msra.mxu0 %v911
    %928 = vmatprep.subr.bf16.mxu0 0
    %929 = vmatpush1.bf16.msra.mxu0 %v912
    %930 = vmatprep.subr.bf16.mxu0 0
    %931 = vmatpush1.bf16.msra.mxu0 %v913
    %932 = vmatprep.subr.bf16.mxu0 0
    %933 = vmatpush1.bf16.msra.mxu0 %v914
    %934 = vmatprep.subr.bf16.mxu0 0
    %935 = vmatpush1.bf16.msra.mxu0 %v915
    %936 = vmatprep.subr.bf16.mxu0 0
    %937 = vmatpush1.bf16.msra.mxu0 %v916
    %938 = vmatprep.subr.bf16.mxu0 0
    %939 = vmatpush1.bf16.msra.mxu0 %v917
    %940 = vmatprep.subr.bf16.mxu0 0
    %941 = vmatpush1.bf16.msra.mxu0 0
    %942 = vmatprep.subr.bf16.mxu0 0
    %943 = vmatpush1.bf16.msra.mxu0 0
    %944 = vmatprep.subr.bf16.mxu0 0
    %945 = vmatpush1.bf16.msra.mxu0 0
    %946 = vmatprep.subr.bf16.mxu0 0
    %947 = vmatpush1.bf16.msra.mxu0 0
    %948 = vmatprep.subr.bf16.mxu0 0
    %949 = vmatpush1.bf16.msra.mxu0 0
    %950 = vmatprep.subr.bf16.mxu0 0
    %951 = vmatpush1.bf16.msra.mxu0 0
    %952 = vmatprep.subr.bf16.mxu0 0
    %953 = vmatpush1.bf16.msra.mxu0 0
    %954 = vmatprep.subr.bf16.mxu0 0
    %955 = vmatpush1.bf16.msra.mxu0 0
    %956 = vmatprep.mubr.bf16.mxu0 0
    %957 = vmatmul.mubr.bf16.gmra.mrb[0].mxu0 %v317
    %v958 = vpop.f32.mrb[0].mxu0
    %v959 = vadd.f32 %v922, %v958
    %v960 = vpop.f32.mrb[0].mxu0
    %v961 = vpop.f32.mrb[0].mxu0
    %v962 = vadd.f32 %v922, %v961
    %v963 = vpop.f32.mrb[0].mxu0
    %964 = vmatprep.mubr.bf16.mxu0 0
    %965 = vmatmul.mubr.bf16.gmra.mrb[0].mxu0 %v318
    %v966 = vpop.f32.mrb[0].mxu0
    %v967 = vadd.f32 %v922, %v966
    %v968 = vpop.f32.mrb[0].mxu0
    %v969 = vpop.f32.mrb[0].mxu0
    %v970 = vadd.f32 %v922, %v969
    %v971 = vpop.f32.mrb[0].mxu0
    %972 = vmatprep.mubr.bf16.mxu0 0
    %973 = vmatmul.mubr.bf16.gmra.mrb[0].mxu0 %v319
    %v974 = vpop.f32.mrb[0].mxu0
    %v975 = vadd.f32 %v922, %v974
    %v976 = vpop.f32.mrb[0].mxu0
    %v977 = vpop.f32.mrb[0].mxu0
    %v978 = vadd.f32 %v922, %v977
    %v979 = vpop.f32.mrb[0].mxu0
    %980 = vmatprep.mubr.bf16.mxu0 0
    %981 = vmatmul.mubr.bf16.gmra.mrb[0].mxu0 %v320
    %v982 = vpop.f32.mrb[0].mxu0
    %v983 = vadd.f32 %v922, %v982
    %v984 = vpop.f32.mrb[0].mxu0
    %v985 = vpop.f32.mrb[0].mxu0
    %v986 = vadd.f32 %v922, %v985
    %v987 = vpop.f32.mrb[0].mxu0
    %988 = vmatprep.mubr.bf16.mxu0 0
    %989 = vmatmul.mubr.bf16.gmra.mrb[0].mxu0 %v321
    %v990 = vpop.f32.mrb[0].mxu0
    %v991 = vadd.f32 %v922, %v990
    %v992 = vpop.f32.mrb[0].mxu0
    %v993 = vpop.f32.mrb[0].mxu0
    %v994 = vadd.f32 %v922, %v993
    %v995 = vpop.f32.mrb[0].mxu0
    %996 = vmatprep.mubr.bf16.mxu0 0
    %997 = vmatmul.mubr.bf16.gmra.mrb[0].mxu0 %v322
    %v998 = vpop.f32.mrb[0].mxu0
    %v999 = vadd.f32 %v922, %v998
    %v1000 = vpop.f32.mrb[0].mxu0
    %v1001 = vpop.f32.mrb[0].mxu0
    %v1002 = vadd.f32 %v922, %v1001
    %v1003 = vpop.f32.mrb[0].mxu0
    %1004 = vmatprep.mubr.bf16.mxu0 0
    %1005 = vmatmul.mubr.bf16.gmra.mrb[0].mxu0 %v323
    %v1006 = vpop.f32.mrb[0].mxu0
    %v1007 = vadd.f32 %v922, %v1006
    %v1008 = vpop.f32.mrb[0].mxu0
    %v1009 = vpop.f32.mrb[0].mxu0
    %v1010 = vadd.f32 %v922, %v1009
    %v1011 = vpop.f32.mrb[0].mxu0
    %1012 = vmatprep.mubr.bf16.mxu0 0
    %1013 = vmatmul.mubr.bf16.gmra.mrb[0].mxu0 %v324
    %v1014 = vpop.f32.mrb[0].mxu0
    %v1015 = vadd.f32 %v922, %v1014
    %v1016 = vpop.f32.mrb[0].mxu0
    %v1017 = vpop.f32.mrb[0].mxu0
    %v1018 = vadd.f32 %v922, %v1017
    %v1019 = vpop.f32.mrb[0].mxu0
    %1020 = vdwg.mxu0
    %v1021 = vmax.f32 %v959, 0.0
    %v1022 = vmax.f32 %v962, 0.0
    %v1023 = vmax.f32 %v967, 0.0
    %v1024 = vmax.f32 %v970, 0.0
    %v1025 = vmax.f32 %v975, 0.0
    %v1026 = vmax.f32 %v978, 0.0
    %v1027 = vmax.f32 %v983, 0.0
    %v1028 = vmax.f32 %v986, 0.0
    %v1029 = vmax.f32 %v991, 0.0
    %v1030 = vmax.f32 %v994, 0.0
    %v1031 = vmax.f32 %v999, 0.0
    %v1032 = vmax.f32 %v1002, 0.0
    %v1033 = vmax.f32 %v1007, 0.0
    %v1034 = vmax.f32 %v1010, 0.0
    %v1035 = vmax.f32 %v1015, 0.0
    %v1036 = vmax.f32 %v1018, 0.0
    %v1037 = vpack.c.bf16 %v1022, %v1021
    %v1038 = vpack.c.bf16 %v1024, %v1023
    %v1039 = vpack.c.bf16 %v1026, %v1025
    %v1040 = vpack.c.bf16 %v1028, %v1027
    %v1041 = vpack.c.bf16 %v1030, %v1029
    %v1042 = vpack.c.bf16 %v1032, %v1031
    %v1043 = vpack.c.bf16 %v1034, %v1033
    %v1044 = vpack.c.bf16 %v1036, %v1035
    %s1045 = scalar_lea.vmem [#allocation9], 128
    %v1046 = vld [vmem:[%s1045] sm:$0xf]
    %v1047 = vld [vmem:[%s1045 + $0x4] sm:$0xf]
    %v1048 = vld [vmem:[%s1045 + $0x8] sm:$0xf]
    %v1049 = vld [vmem:[%s1045 + $0xc] sm:$0xf]
    %v1050 = vld [vmem:[%s1045 + $0x10] sm:$0xf]
    %v1051 = vld [vmem:[%s1045 + $0x14] sm:$0xf]
    %v1052 = vld [vmem:[%s1045 + $0x18] sm:$0xf]
    %v1053 = vld [vmem:[%s1045 + $0x1c] sm:$0xf]
    %v1054 = vld [vmem:[%s1045 + $0x20] sm:$0xf]
    %v1055 = vld [vmem:[%s1045 + $0x24] sm:$0xf]
    %v1056 = vld [vmem:[%s1045 + $0x28] sm:$0xf]
    %v1057 = vld [vmem:[%s1045 + $0x2c] sm:$0xf]
    %v1058 = vld [vmem:[%s1045 + $0x30] sm:$0xf]
    %v1059 = vld [vmem:[%s1045 + $0x34] sm:$0xf]
    %v1060 = vld [vmem:[%s1045 + $0x38] sm:$0xf]
    %v1061 = vld [vmem:[%s1045 + $0x3c] sm:$0xf]
    %v1078 = vunpack.c.l.b16 %v1046
    %v1079 = vunpack.c.l.b16 %v1047
    %v1080 = vunpack.c.l.b16 %v1048
    %v1081 = vunpack.c.l.b16 %v1049
    %v1082 = vunpack.c.l.b16 %v1050
    %v1083 = vunpack.c.l.b16 %v1051
    %v1084 = vunpack.c.l.b16 %v1052
    %v1085 = vunpack.c.l.b16 %v1053
    %v1086 = vunpack.c.l.b16 %v1054
    %v1087 = vunpack.c.l.b16 %v1055
    %v1088 = vunpack.c.l.b16 %v1056
    %v1089 = vunpack.c.l.b16 %v1057
    %v1090 = vunpack.c.l.b16 %v1058
    %v1091 = vunpack.c.l.b16 %v1059
    %v1092 = vunpack.c.l.b16 %v1060
    %v1093 = vunpack.c.l.b16 %v1061
    %v1094 = vpack.c.b16 %v1079, %v1078
    %v1095 = vpack.c.b16 %v1081, %v1080
    %v1096 = vpack.c.b16 %v1083, %v1082
    %v1097 = vpack.c.b16 %v1085, %v1084
    %v1098 = vpack.c.b16 %v1087, %v1086
    %v1099 = vpack.c.b16 %v1089, %v1088
    %v1100 = vpack.c.b16 %v1091, %v1090
    %v1101 = vpack.c.b16 %v1093, %v1092
    %1110 = vmatprep.subr.bf16.mxu0 0
    %1111 = vmatpush1.bf16.msra.mxu0 %v1094
    %1112 = vmatprep.subr.bf16.mxu0 0
    %1113 = vmatpush1.bf16.msra.mxu0 %v1095
    %1114 = vmatprep.subr.bf16.mxu0 0
    %1115 = vmatpush1.bf16.msra.mxu0 %v1096
    %1116 = vmatprep.subr.bf16.mxu0 0
    %1117 = vmatpush1.bf16.msra.mxu0 %v1097
    %1118 = vmatprep.subr.bf16.mxu0 0
    %1119 = vmatpush1.bf16.msra.mxu0 %v1098
    %1120 = vmatprep.subr.bf16.mxu0 0
    %1121 = vmatpush1.bf16.msra.mxu0 %v1099
    %1122 = vmatprep.subr.bf16.mxu0 0
    %1123 = vmatpush1.bf16.msra.mxu0 %v1100
    %1124 = vmatprep.subr.bf16.mxu0 0
    %1125 = vmatpush1.bf16.msra.mxu0 %v1101
    %1126 = vmatprep.subr.bf16.mxu0 0
    %1127 = vmatpush1.bf16.msra.mxu0 0
    %1128 = vmatprep.subr.bf16.mxu0 0
    %1129 = vmatpush1.bf16.msra.mxu0 0
    %1130 = vmatprep.subr.bf16.mxu0 0
    %1131 = vmatpush1.bf16.msra.mxu0 0
    %1132 = vmatprep.subr.bf16.mxu0 0
    %1133 = vmatpush1.bf16.msra.mxu0 0
    %1134 = vmatprep.subr.bf16.mxu0 0
    %1135 = vmatpush1.bf16.msra.mxu0 0
    %1136 = vmatprep.subr.bf16.mxu0 0
    %1137 = vmatpush1.bf16.msra.mxu0 0
    %1138 = vmatprep.subr.bf16.mxu0 0
    %1139 = vmatpush1.bf16.msra.mxu0 0
    %1140 = vmatprep.subr.bf16.mxu0 0
    %1141 = vmatpush1.bf16.msra.mxu0 0
    %1142 = vmatprep.mubr.bf16.mxu0 0
    %1143 = vmatmul.mubr.bf16.gmra.mrb[0].mxu0 %v1037
    %v1144 = vpop.f32.mrb[0].mxu0
    %v1145 = vadd.f32 0.0, %v1144
    %v1146 = vpop.f32.mrb[0].mxu0
    %v1147 = vpop.f32.mrb[0].mxu0
    %v1148 = vadd.f32 0.0, %v1147
    %v1149 = vpop.f32.mrb[0].mxu0
    %1150 = vmatprep.mubr.bf16.mxu0 0
    %1151 = vmatmul.mubr.bf16.gmra.mrb[0].mxu0 %v1038
    %v1152 = vpop.f32.mrb[0].mxu0
    %v1153 = vadd.f32 0.0, %v1152
    %v1154 = vpop.f32.mrb[0].mxu0
    %v1155 = vpop.f32.mrb[0].mxu0
    %v1156 = vadd.f32 0.0, %v1155
    %v1157 = vpop.f32.mrb[0].mxu0
    %1158 = vmatprep.mubr.bf16.mxu0 0
    %1159 = vmatmul.mubr.bf16.gmra.mrb[0].mxu0 %v1039
    %v1160 = vpop.f32.mrb[0].mxu0
    %v1161 = vadd.f32 0.0, %v1160
    %v1162 = vpop.f32.mrb[0].mxu0
    %v1163 = vpop.f32.mrb[0].mxu0
    %v1164 = vadd.f32 0.0, %v1163
    %v1165 = vpop.f32.mrb[0].mxu0
    %1166 = vmatprep.mubr.bf16.mxu0 0
    %1167 = vmatmul.mubr.bf16.gmra.mrb[0].mxu0 %v1040
    %v1168 = vpop.f32.mrb[0].mxu0
    %v1169 = vadd.f32 0.0, %v1168
    %v1170 = vpop.f32.mrb[0].mxu0
    %v1171 = vpop.f32.mrb[0].mxu0
    %v1172 = vadd.f32 0.0, %v1171
    %v1173 = vpop.f32.mrb[0].mxu0
    %1174 = vmatprep.mubr.bf16.mxu0 0
    %1175 = vmatmul.mubr.bf16.gmra.mrb[0].mxu0 %v1041
    %v1176 = vpop.f32.mrb[0].mxu0
    %v1177 = vadd.f32 0.0, %v1176
    %v1178 = vpop.f32.mrb[0].mxu0
    %v1179 = vpop.f32.mrb[0].mxu0
    %v1180 = vadd.f32 0.0, %v1179
    %v1181 = vpop.f32.mrb[0].mxu0
    %1182 = vmatprep.mubr.bf16.mxu0 0
    %1183 = vmatmul.mubr.bf16.gmra.mrb[0].mxu0 %v1042
    %v1184 = vpop.f32.mrb[0].mxu0
    %v1185 = vadd.f32 0.0, %v1184
    %v1186 = vpop.f32.mrb[0].mxu0
    %v1187 = vpop.f32.mrb[0].mxu0
    %v1188 = vadd.f32 0.0, %v1187
    %v1189 = vpop.f32.mrb[0].mxu0
    %1190 = vmatprep.mubr.bf16.mxu0 0
    %1191 = vmatmul.mubr.bf16.gmra.mrb[0].mxu0 %v1043
    %v1192 = vpop.f32.mrb[0].mxu0
    %v1193 = vadd.f32 0.0, %v1192
    %v1194 = vpop.f32.mrb[0].mxu0
    %v1195 = vpop.f32.mrb[0].mxu0
    %v1196 = vadd.f32 0.0, %v1195
    %v1197 = vpop.f32.mrb[0].mxu0
    %1198 = vmatprep.mubr.bf16.mxu0 0
    %1199 = vmatmul.mubr.bf16.gmra.mrb[0].mxu0 %v1044
    %v1200 = vpop.f32.mrb[0].mxu0
    %v1201 = vadd.f32 0.0, %v1200
    %v1202 = vpop.f32.mrb[0].mxu0
    %v1203 = vpop.f32.mrb[0].mxu0
    %v1204 = vadd.f32 0.0, %v1203
    %v1205 = vpop.f32.mrb[0].mxu0
    %1206 = vdwg.mxu0
    %v1207 = vpack.c.bf16 %v1148, %v1145
    %v1208 = vpack.c.bf16 %v1156, %v1153
    %v1209 = vpack.c.bf16 %v1164, %v1161
    %v1210 = vpack.c.bf16 %v1172, %v1169
    %v1211 = vpack.c.bf16 %v1180, %v1177
    %v1212 = vpack.c.bf16 %v1188, %v1185
    %v1213 = vpack.c.bf16 %v1196, %v1193
    %v1214 = vpack.c.bf16 %v1204, %v1201
    %v1216 = vlaneseq
    %v1217 = vshrl.u32 %v1216, 7
    %v1218 = vsub.s32 0, %v1217
    %v1219 = vrot.slane %v78, %v1218
    %1221 = vmatprep.subr.bf16.mxu0 0
    %1222 = vmatpush1.bf16.msra.mxu0 %v1207
    %1223 = vmatprep.subr.bf16.mxu0 0
    %1224 = vmatpush1.bf16.msra.mxu0 %v1208
    %1225 = vmatprep.subr.bf16.mxu0 0
    %1226 = vmatpush1.bf16.msra.mxu0 %v1209
    %1227 = vmatprep.subr.bf16.mxu0 0
    %1228 = vmatpush1.bf16.msra.mxu0 %v1210
    %1229 = vmatprep.subr.bf16.mxu0 0
    %1230 = vmatpush1.bf16.msra.mxu0 %v1211
    %1231 = vmatprep.subr.bf16.mxu0 0
    %1232 = vmatpush1.bf16.msra.mxu0 %v1212
    %1233 = vmatprep.subr.bf16.mxu0 0
    %1234 = vmatpush1.bf16.msra.mxu0 %v1213
    %1235 = vmatprep.subr.bf16.mxu0 0
    %1236 = vmatpush1.bf16.msra.mxu0 %v1214
    %1237 = vmatprep.subr.bf16.mxu0 0
    %1238 = vmatpush1.bf16.msra.mxu0 0
    %1239 = vmatprep.subr.bf16.mxu0 0
    %1240 = vmatpush1.bf16.msra.mxu0 0
    %1241 = vmatprep.subr.bf16.mxu0 0
    %1242 = vmatpush1.bf16.msra.mxu0 0
    %1243 = vmatprep.subr.bf16.mxu0 0
    %1244 = vmatpush1.bf16.msra.mxu0 0
    %1245 = vmatprep.subr.bf16.mxu0 0
    %1246 = vmatpush1.bf16.msra.mxu0 0
    %1247 = vmatprep.subr.bf16.mxu0 0
    %1248 = vmatpush1.bf16.msra.mxu0 0
    %1249 = vmatprep.subr.bf16.mxu0 0
    %1250 = vmatpush1.bf16.msra.mxu0 0
    %1251 = vmatprep.subr.bf16.mxu0 0
    %1252 = vmatpush1.bf16.msra.mxu0 0
    %1253 = vmatprep.mubr.bf16.mxu0 0
    %1254 = vmatmul.mubr.bf16.gmra.mrb[0].mxu0 %v317
    %v1255 = vpop.f32.mrb[0].mxu0
    %v1256 = vadd.f32 %v1219, %v1255
    %v1257 = vpop.f32.mrb[0].mxu0
    %v1258 = vpop.f32.mrb[0].mxu0
    %v1259 = vadd.f32 %v1219, %v1258
    %v1260 = vpop.f32.mrb[0].mxu0
    %1261 = vmatprep.mubr.bf16.mxu0 0
    %1262 = vmatmul.mubr.bf16.gmra.mrb[0].mxu0 %v318
    %v1263 = vpop.f32.mrb[0].mxu0
    %v1264 = vadd.f32 %v1219, %v1263
    %v1265 = vpop.f32.mrb[0].mxu0
    %v1266 = vpop.f32.mrb[0].mxu0
    %v1267 = vadd.f32 %v1219, %v1266
    %v1268 = vpop.f32.mrb[0].mxu0
    %1269 = vmatprep.mubr.bf16.mxu0 0
    %1270 = vmatmul.mubr.bf16.gmra.mrb[0].mxu0 %v319
    %v1271 = vpop.f32.mrb[0].mxu0
    %v1272 = vadd.f32 %v1219, %v1271
    %v1273 = vpop.f32.mrb[0].mxu0
    %v1274 = vpop.f32.mrb[0].mxu0
    %v1275 = vadd.f32 %v1219, %v1274
    %v1276 = vpop.f32.mrb[0].mxu0
    %1277 = vmatprep.mubr.bf16.mxu0 0
    %1278 = vmatmul.mubr.bf16.gmra.mrb[0].mxu0 %v320
    %v1279 = vpop.f32.mrb[0].mxu0
    %v1280 = vadd.f32 %v1219, %v1279
    %v1281 = vpop.f32.mrb[0].mxu0
    %v1282 = vpop.f32.mrb[0].mxu0
    %v1283 = vadd.f32 %v1219, %v1282
    %v1284 = vpop.f32.mrb[0].mxu0
    %1285 = vmatprep.mubr.bf16.mxu0 0
    %1286 = vmatmul.mubr.bf16.gmra.mrb[0].mxu0 %v321
    %v1287 = vpop.f32.mrb[0].mxu0
    %v1288 = vadd.f32 %v1219, %v1287
    %v1289 = vpop.f32.mrb[0].mxu0
    %v1290 = vpop.f32.mrb[0].mxu0
    %v1291 = vadd.f32 %v1219, %v1290
    %v1292 = vpop.f32.mrb[0].mxu0
    %1293 = vmatprep.mubr.bf16.mxu0 0
    %1294 = vmatmul.mubr.bf16.gmra.mrb[0].mxu0 %v322
    %v1295 = vpop.f32.mrb[0].mxu0
    %v1296 = vadd.f32 %v1219, %v1295
    %v1297 = vpop.f32.mrb[0].mxu0
    %v1298 = vpop.f32.mrb[0].mxu0
    %v1299 = vadd.f32 %v1219, %v1298
    %v1300 = vpop.f32.mrb[0].mxu0
    %1301 = vmatprep.mubr.bf16.mxu0 0
    %1302 = vmatmul.mubr.bf16.gmra.mrb[0].mxu0 %v323
    %v1303 = vpop.f32.mrb[0].mxu0
    %v1304 = vadd.f32 %v1219, %v1303
    %v1305 = vpop.f32.mrb[0].mxu0
    %v1306 = vpop.f32.mrb[0].mxu0
    %v1307 = vadd.f32 %v1219, %v1306
    %v1308 = vpop.f32.mrb[0].mxu0
    %1309 = vmatprep.mubr.bf16.mxu0 0
    %1310 = vmatmul.mubr.bf16.gmra.mrb[0].mxu0 %v324
    %v1311 = vpop.f32.mrb[0].mxu0
    %v1312 = vadd.f32 %v1219, %v1311
    %v1313 = vpop.f32.mrb[0].mxu0
    %v1314 = vpop.f32.mrb[0].mxu0
    %v1315 = vadd.f32 %v1219, %v1314
    %v1316 = vpop.f32.mrb[0].mxu0
    %1317 = vdwg.mxu0
    %v1318 = vmax.f32 %v1256, 0.0
    %v1319 = vmax.f32 %v1259, 0.0
    %v1320 = vmax.f32 %v1264, 0.0
    %v1321 = vmax.f32 %v1267, 0.0
    %v1322 = vmax.f32 %v1272, 0.0
    %v1323 = vmax.f32 %v1275, 0.0
    %v1324 = vmax.f32 %v1280, 0.0
    %v1325 = vmax.f32 %v1283, 0.0
    %v1326 = vmax.f32 %v1288, 0.0
    %v1327 = vmax.f32 %v1291, 0.0
    %v1328 = vmax.f32 %v1296, 0.0
    %v1329 = vmax.f32 %v1299, 0.0
    %v1330 = vmax.f32 %v1304, 0.0
    %v1331 = vmax.f32 %v1307, 0.0
    %v1332 = vmax.f32 %v1312, 0.0
    %v1333 = vmax.f32 %v1315, 0.0
    %v1334 = vpack.c.bf16 %v1319, %v1318
    %v1335 = vpack.c.bf16 %v1321, %v1320
    %v1336 = vpack.c.bf16 %v1323, %v1322
    %v1337 = vpack.c.bf16 %v1325, %v1324
    %v1338 = vpack.c.bf16 %v1327, %v1326
    %v1339 = vpack.c.bf16 %v1329, %v1328
    %v1340 = vpack.c.bf16 %v1331, %v1330
    %v1341 = vpack.c.bf16 %v1333, %v1332
    %s1342 = scalar_lea.vmem [#allocation9], 192
    %v1343 = vld [vmem:[%s1342] sm:$0xf]
    %v1344 = vld [vmem:[%s1342 + $0x4] sm:$0xf]
    %v1345 = vld [vmem:[%s1342 + $0x8] sm:$0xf]
    %v1346 = vld [vmem:[%s1342 + $0xc] sm:$0xf]
    %v1347 = vld [vmem:[%s1342 + $0x10] sm:$0xf]
    %v1348 = vld [vmem:[%s1342 + $0x14] sm:$0xf]
    %v1349 = vld [vmem:[%s1342 + $0x18] sm:$0xf]
    %v1350 = vld [vmem:[%s1342 + $0x1c] sm:$0xf]
    %v1351 = vld [vmem:[%s1342 + $0x20] sm:$0xf]
    %v1352 = vld [vmem:[%s1342 + $0x24] sm:$0xf]
    %v1353 = vld [vmem:[%s1342 + $0x28] sm:$0xf]
    %v1354 = vld [vmem:[%s1342 + $0x2c] sm:$0xf]
    %v1355 = vld [vmem:[%s1342 + $0x30] sm:$0xf]
    %v1356 = vld [vmem:[%s1342 + $0x34] sm:$0xf]
    %v1357 = vld [vmem:[%s1342 + $0x38] sm:$0xf]
    %v1358 = vld [vmem:[%s1342 + $0x3c] sm:$0xf]
    %v1375 = vunpack.c.l.b16 %v1343
    %v1376 = vunpack.c.l.b16 %v1344
    %v1377 = vunpack.c.l.b16 %v1345
    %v1378 = vunpack.c.l.b16 %v1346
    %v1379 = vunpack.c.l.b16 %v1347
    %v1380 = vunpack.c.l.b16 %v1348
    %v1381 = vunpack.c.l.b16 %v1349
    %v1382 = vunpack.c.l.b16 %v1350
    %v1383 = vunpack.c.l.b16 %v1351
    %v1384 = vunpack.c.l.b16 %v1352
    %v1385 = vunpack.c.l.b16 %v1353
    %v1386 = vunpack.c.l.b16 %v1354
    %v1387 = vunpack.c.l.b16 %v1355
    %v1388 = vunpack.c.l.b16 %v1356
    %v1389 = vunpack.c.l.b16 %v1357
    %v1390 = vunpack.c.l.b16 %v1358
    %v1391 = vpack.c.b16 %v1376, %v1375
    %v1392 = vpack.c.b16 %v1378, %v1377
    %v1393 = vpack.c.b16 %v1380, %v1379
    %v1394 = vpack.c.b16 %v1382, %v1381
    %v1395 = vpack.c.b16 %v1384, %v1383
    %v1396 = vpack.c.b16 %v1386, %v1385
    %v1397 = vpack.c.b16 %v1388, %v1387
    %v1398 = vpack.c.b16 %v1390, %v1389
    %1407 = vmatprep.subr.bf16.mxu0 0
    %1408 = vmatpush1.bf16.msra.mxu0 %v1391
    %1409 = vmatprep.subr.bf16.mxu0 0
    %1410 = vmatpush1.bf16.msra.mxu0 %v1392
    %1411 = vmatprep.subr.bf16.mxu0 0
    %1412 = vmatpush1.bf16.msra.mxu0 %v1393
    %1413 = vmatprep.subr.bf16.mxu0 0
    %1414 = vmatpush1.bf16.msra.mxu0 %v1394
    %1415 = vmatprep.subr.bf16.mxu0 0
    %1416 = vmatpush1.bf16.msra.mxu0 %v1395
    %1417 = vmatprep.subr.bf16.mxu0 0
    %1418 = vmatpush1.bf16.msra.mxu0 %v1396
    %1419 = vmatprep.subr.bf16.mxu0 0
    %1420 = vmatpush1.bf16.msra.mxu0 %v1397
    %1421 = vmatprep.subr.bf16.mxu0 0
    %1422 = vmatpush1.bf16.msra.mxu0 %v1398
    %1423 = vmatprep.subr.bf16.mxu0 0
    %1424 = vmatpush1.bf16.msra.mxu0 0
    %1425 = vmatprep.subr.bf16.mxu0 0
    %1426 = vmatpush1.bf16.msra.mxu0 0
    %1427 = vmatprep.subr.bf16.mxu0 0
    %1428 = vmatpush1.bf16.msra.mxu0 0
    %1429 = vmatprep.subr.bf16.mxu0 0
    %1430 = vmatpush1.bf16.msra.mxu0 0
    %1431 = vmatprep.subr.bf16.mxu0 0
    %1432 = vmatpush1.bf16.msra.mxu0 0
    %1433 = vmatprep.subr.bf16.mxu0 0
    %1434 = vmatpush1.bf16.msra.mxu0 0
    %1435 = vmatprep.subr.bf16.mxu0 0
    %1436 = vmatpush1.bf16.msra.mxu0 0
    %1437 = vmatprep.subr.bf16.mxu0 0
    %1438 = vmatpush1.bf16.msra.mxu0 0
    %1439 = vmatprep.mubr.bf16.mxu0 0
    %1440 = vmatmul.mubr.bf16.gmra.mrb[0].mxu0 %v1334
    %v1441 = vpop.f32.mrb[0].mxu0
    %v1442 = vadd.f32 0.0, %v1441
    %v1443 = vpop.f32.mrb[0].mxu0
    %v1444 = vpop.f32.mrb[0].mxu0
    %v1445 = vadd.f32 0.0, %v1444
    %v1446 = vpop.f32.mrb[0].mxu0
    %1447 = vmatprep.mubr.bf16.mxu0 0
    %1448 = vmatmul.mubr.bf16.gmra.mrb[0].mxu0 %v1335
    %v1449 = vpop.f32.mrb[0].mxu0
    %v1450 = vadd.f32 0.0, %v1449
    %v1451 = vpop.f32.mrb[0].mxu0
    %v1452 = vpop.f32.mrb[0].mxu0
    %v1453 = vadd.f32 0.0, %v1452
    %v1454 = vpop.f32.mrb[0].mxu0
    %1455 = vmatprep.mubr.bf16.mxu0 0
    %1456 = vmatmul.mubr.bf16.gmra.mrb[0].mxu0 %v1336
    %v1457 = vpop.f32.mrb[0].mxu0
    %v1458 = vadd.f32 0.0, %v1457
    %v1459 = vpop.f32.mrb[0].mxu0
    %v1460 = vpop.f32.mrb[0].mxu0
    %v1461 = vadd.f32 0.0, %v1460
    %v1462 = vpop.f32.mrb[0].mxu0
    %1463 = vmatprep.mubr.bf16.mxu0 0
    %1464 = vmatmul.mubr.bf16.gmra.mrb[0].mxu0 %v1337
    %v1465 = vpop.f32.mrb[0].mxu0
    %v1466 = vadd.f32 0.0, %v1465
    %v1467 = vpop.f32.mrb[0].mxu0
    %v1468 = vpop.f32.mrb[0].mxu0
    %v1469 = vadd.f32 0.0, %v1468
    %v1470 = vpop.f32.mrb[0].mxu0
    %1471 = vmatprep.mubr.bf16.mxu0 0
    %1472 = vmatmul.mubr.bf16.gmra.mrb[0].mxu0 %v1338
    %v1473 = vpop.f32.mrb[0].mxu0
    %v1474 = vadd.f32 0.0, %v1473
    %v1475 = vpop.f32.mrb[0].mxu0
    %v1476 = vpop.f32.mrb[0].mxu0
    %v1477 = vadd.f32 0.0, %v1476
    %v1478 = vpop.f32.mrb[0].mxu0
    %1479 = vmatprep.mubr.bf16.mxu0 0
    %1480 = vmatmul.mubr.bf16.gmra.mrb[0].mxu0 %v1339
    %v1481 = vpop.f32.mrb[0].mxu0
    %v1482 = vadd.f32 0.0, %v1481
    %v1483 = vpop.f32.mrb[0].mxu0
    %v1484 = vpop.f32.mrb[0].mxu0
    %v1485 = vadd.f32 0.0, %v1484
    %v1486 = vpop.f32.mrb[0].mxu0
    %1487 = vmatprep.mubr.bf16.mxu0 0
    %1488 = vmatmul.mubr.bf16.gmra.mrb[0].mxu0 %v1340
    %v1489 = vpop.f32.mrb[0].mxu0
    %v1490 = vadd.f32 0.0, %v1489
    %v1491 = vpop.f32.mrb[0].mxu0
    %v1492 = vpop.f32.mrb[0].mxu0
    %v1493 = vadd.f32 0.0, %v1492
    %v1494 = vpop.f32.mrb[0].mxu0
    %1495 = vmatprep.mubr.bf16.mxu0 0
    %1496 = vmatmul.mubr.bf16.gmra.mrb[0].mxu0 %v1341
    %v1497 = vpop.f32.mrb[0].mxu0
    %v1498 = vadd.f32 0.0, %v1497
    %v1499 = vpop.f32.mrb[0].mxu0
    %v1500 = vpop.f32.mrb[0].mxu0
    %v1501 = vadd.f32 0.0, %v1500
    %v1502 = vpop.f32.mrb[0].mxu0
    %1503 = vdwg.mxu0
    %v1504 = vpack.c.bf16 %v1445, %v1442
    %v1505 = vpack.c.bf16 %v1453, %v1450
    %v1506 = vpack.c.bf16 %v1461, %v1458
    %v1507 = vpack.c.bf16 %v1469, %v1466
    %v1508 = vpack.c.bf16 %v1477, %v1474
    %v1509 = vpack.c.bf16 %v1485, %v1482
    %v1510 = vpack.c.bf16 %v1493, %v1490
    %v1511 = vpack.c.bf16 %v1501, %v1498
    %v1513 = vlaneseq
    %v1514 = vshrl.u32 %v1513, 7
    %v1515 = vsub.s32 0, %v1514
    %v1516 = vrot.slane %v79, %v1515
    %1518 = vmatprep.subr.bf16.mxu0 0
    %1519 = vmatpush1.bf16.msra.mxu0 %v1504
    %1520 = vmatprep.subr.bf16.mxu0 0
    %1521 = vmatpush1.bf16.msra.mxu0 %v1505
    %1522 = vmatprep.subr.bf16.mxu0 0
    %1523 = vmatpush1.bf16.msra.mxu0 %v1506
    %1524 = vmatprep.subr.bf16.mxu0 0
    %1525 = vmatpush1.bf16.msra.mxu0 %v1507
    %1526 = vmatprep.subr.bf16.mxu0 0
    %1527 = vmatpush1.bf16.msra.mxu0 %v1508
    %1528 = vmatprep.subr.bf16.mxu0 0
    %1529 = vmatpush1.bf16.msra.mxu0 %v1509
    %1530 = vmatprep.subr.bf16.mxu0 0
    %1531 = vmatpush1.bf16.msra.mxu0 %v1510
    %1532 = vmatprep.subr.bf16.mxu0 0
    %1533 = vmatpush1.bf16.msra.mxu0 %v1511
    %1534 = vmatprep.subr.bf16.mxu0 0
    %1535 = vmatpush1.bf16.msra.mxu0 0
    %1536 = vmatprep.subr.bf16.mxu0 0
    %1537 = vmatpush1.bf16.msra.mxu0 0
    %1538 = vmatprep.subr.bf16.mxu0 0
    %1539 = vmatpush1.bf16.msra.mxu0 0
    %1540 = vmatprep.subr.bf16.mxu0 0
    %1541 = vmatpush1.bf16.msra.mxu0 0
    %1542 = vmatprep.subr.bf16.mxu0 0
    %1543 = vmatpush1.bf16.msra.mxu0 0
    %1544 = vmatprep.subr.bf16.mxu0 0
    %1545 = vmatpush1.bf16.msra.mxu0 0
    %1546 = vmatprep.subr.bf16.mxu0 0
    %1547 = vmatpush1.bf16.msra.mxu0 0
    %1548 = vmatprep.subr.bf16.mxu0 0
    %1549 = vmatpush1.bf16.msra.mxu0 0
    %1550 = vmatprep.mubr.bf16.mxu0 0
    %1551 = vmatmul.mubr.bf16.gmra.mrb[0].mxu0 %v317
    %v1552 = vpop.f32.mrb[0].mxu0
    %v1553 = vadd.f32 %v1516, %v1552
    %v1554 = vpop.f32.mrb[0].mxu0
    %v1555 = vpop.f32.mrb[0].mxu0
    %v1556 = vadd.f32 %v1516, %v1555
    %v1557 = vpop.f32.mrb[0].mxu0
    %1558 = vmatprep.mubr.bf16.mxu0 0
    %1559 = vmatmul.mubr.bf16.gmra.mrb[0].mxu0 %v318
    %v1560 = vpop.f32.mrb[0].mxu0
    %v1561 = vadd.f32 %v1516, %v1560
    %v1562 = vpop.f32.mrb[0].mxu0
    %v1563 = vpop.f32.mrb[0].mxu0
    %v1564 = vadd.f32 %v1516, %v1563
    %v1565 = vpop.f32.mrb[0].mxu0
    %1566 = vmatprep.mubr.bf16.mxu0 0
    %1567 = vmatmul.mubr.bf16.gmra.mrb[0].mxu0 %v319
    %v1568 = vpop.f32.mrb[0].mxu0
    %v1569 = vadd.f32 %v1516, %v1568
    %v1570 = vpop.f32.mrb[0].mxu0
    %v1571 = vpop.f32.mrb[0].mxu0
    %v1572 = vadd.f32 %v1516, %v1571
    %v1573 = vpop.f32.mrb[0].mxu0
    %1574 = vmatprep.mubr.bf16.mxu0 0
    %1575 = vmatmul.mubr.bf16.gmra.mrb[0].mxu0 %v320
    %v1576 = vpop.f32.mrb[0].mxu0
    %v1577 = vadd.f32 %v1516, %v1576
    %v1578 = vpop.f32.mrb[0].mxu0
    %v1579 = vpop.f32.mrb[0].mxu0
    %v1580 = vadd.f32 %v1516, %v1579
    %v1581 = vpop.f32.mrb[0].mxu0
    %1582 = vmatprep.mubr.bf16.mxu0 0
    %1583 = vmatmul.mubr.bf16.gmra.mrb[0].mxu0 %v321
    %v1584 = vpop.f32.mrb[0].mxu0
    %v1585 = vadd.f32 %v1516, %v1584
    %v1586 = vpop.f32.mrb[0].mxu0
    %v1587 = vpop.f32.mrb[0].mxu0
    %v1588 = vadd.f32 %v1516, %v1587
    %v1589 = vpop.f32.mrb[0].mxu0
    %1590 = vmatprep.mubr.bf16.mxu0 0
    %1591 = vmatmul.mubr.bf16.gmra.mrb[0].mxu0 %v322
    %v1592 = vpop.f32.mrb[0].mxu0
    %v1593 = vadd.f32 %v1516, %v1592
    %v1594 = vpop.f32.mrb[0].mxu0
    %v1595 = vpop.f32.mrb[0].mxu0
    %v1596 = vadd.f32 %v1516, %v1595
    %v1597 = vpop.f32.mrb[0].mxu0
    %1598 = vmatprep.mubr.bf16.mxu0 0
    %1599 = vmatmul.mubr.bf16.gmra.mrb[0].mxu0 %v323
    %v1600 = vpop.f32.mrb[0].mxu0
    %v1601 = vadd.f32 %v1516, %v1600
    %v1602 = vpop.f32.mrb[0].mxu0
    %v1603 = vpop.f32.mrb[0].mxu0
    %v1604 = vadd.f32 %v1516, %v1603
    %v1605 = vpop.f32.mrb[0].mxu0
    %1606 = vmatprep.mubr.bf16.mxu0 0
    %1607 = vmatmul.mubr.bf16.gmra.mrb[0].mxu0 %v324
    %v1608 = vpop.f32.mrb[0].mxu0
    %v1609 = vadd.f32 %v1516, %v1608
    %v1610 = vpop.f32.mrb[0].mxu0
    %v1611 = vpop.f32.mrb[0].mxu0
    %v1612 = vadd.f32 %v1516, %v1611
    %v1613 = vpop.f32.mrb[0].mxu0
    %1614 = vdwg.mxu0
    %1615 = vst [vmem:[#allocation10] sm:$0xff] %v1553
    %1616 = vst [vmem:[#allocation10 + $0x8] sm:$0xff] %v1556
    %1617 = vst [vmem:[#allocation10 + $0x10] sm:$0xff] %v1561
    %1618 = vst [vmem:[#allocation10 + $0x18] sm:$0xff] %v1564
    %1619 = vst [vmem:[#allocation10 + $0x20] sm:$0xff] %v1569
    %1620 = vst [vmem:[#allocation10 + $0x28] sm:$0xff] %v1572
    %1621 = vst [vmem:[#allocation10 + $0x30] sm:$0xff] %v1577
    %1622 = vst [vmem:[#allocation10 + $0x38] sm:$0xff] %v1580
    %1623 = vst [vmem:[#allocation10 + $0x40] sm:$0xff] %v1585
    %1624 = vst [vmem:[#allocation10 + $0x48] sm:$0xff] %v1588
    %1625 = vst [vmem:[#allocation10 + $0x50] sm:$0xff] %v1593
    %1626 = vst [vmem:[#allocation10 + $0x58] sm:$0xff] %v1596
    %1627 = vst [vmem:[#allocation10 + $0x60] sm:$0xff] %v1601
    %1628 = vst [vmem:[#allocation10 + $0x68] sm:$0xff] %v1604
    %1629 = vst [vmem:[#allocation10 + $0x70] sm:$0xff] %v1609
    %1630 = vst [vmem:[#allocation10 + $0x78] sm:$0xff] %v1612
    // Predicated region
    $region38: #{tpu_custom_call.1} parent=1 // pred_check
      _
    $region39: #{tpu_custom_call.1} parent=1 // pred_check_branch
      %1632 = sbr.rel (0) target = $region41
    $region40: #{tpu_custom_call.1} parent=1 // pred_region
      %s1634 = ssub.s32 2048, 2048
      %1635 = vsyncadd [#allocation6], %s1634
      %s1636 = sshll.u32 [#allocation10], 4
      %s1637 = int_to_ptr.vmem [resolvable:$true] %s1636
      %1642 = dma.vmem_to_hbm [thread:$0]  %s1637, 2048, %s6, [#allocation6], 128, 128, 8
    $region41: #{tpu_custom_call.1} parent=1 // pred_fallthru
      _
    // Predicated region
    $region42: #{tpu_custom_call.1} parent=1 // pred_check
      _
    $region43: #{tpu_custom_call.1} parent=1 // pred_check_branch
      %1644 = sbr.rel (0) target = $region45
    $region44: #{tpu_custom_call.1} parent=1 // pred_region
      %1645 = dma.done [#allocation6], 2048
    $region45: #{tpu_custom_call.1} parent=1 // pred_fallthru
      _
    %1646 = vsyncpa [#allocation5], 1
    %1647 = vsyncpa [#allocation8], 1
    %1648 = vsyncpa [#allocation6], 1
  %1649 = vsyncmov [#allocation3]
  %s1650 = vpop.sfrf %1649
  %p1651 = scmp.eq.s32.totalorder %s1650, 0
  %p1652 = pneg %p1651
  %1654 = shalt.err (%p1652)

</llo_original>
